<compile_context>
chip_gen: v7x
topology: tpu7x:2x2x1
jax: 0.10.0
libtpu: 0.0.40
codegen_flags: <defaults>
</compile_context>

<pallas_src>
import functools

import jax
import jax.numpy as jnp
from jax import lax
from jax.experimental import pallas as pl
from jax.experimental.pallas import tpu as pltpu

STATE_SPACE = 8        # `state_space` is an undefined global in the PyTorch snippet; use 8.
HIDDEN = 256
MAX_BATCH_TILE = 2048  # amortizes per-step overhead; f32 [256, bt] temporaries stay small


def _round_up(n, m):
    return ((n + m - 1) // m) * m


def _pick_batch_tile(batch):
    """Lane-aligned batch tile: big enough to amortize the ~0.35 us/step overhead,
    >= 2 grid steps for large batches (v7x megacore sharding of the 'parallel'
    axis), capped so intermediates stay well inside scoped VMEM on all chips."""
    bt_full = _round_up(batch, 128)
    if bt_full <= 512:
        return bt_full
    half = _round_up((bt_full + 1) // 2, 128)
    return min(MAX_BATCH_TILE, half)


def _default_fast_epilogue():
    """True (v6e/v7x & default): bf16 bias/relu + MXU 256->1 output layer.
    False (v5e and older): f32 VPU epilogue + VPU/XLU 256->1 reduce (those chips
    are MXU-bound at these shapes and have no bf16 VALU)."""
    try:
        kind = jax.devices()[0].device_kind.lower()
    except Exception:
        return True
    for tag in ("v5 lite", "v5e", "v5litepod", "v4", "v3", "v2"):
        if tag in kind:
            return False
    return True


def _disc_kernel(x_ref, w1_ref, b1_ref, w2_ref, b2_ref, w3_ref, b3_ref,
                 w4_ref, b4_ref, o_ref, *, fast_epilogue):
    """Fused 4-layer MLP on one batch tile; activations are [features, batch]."""
    # fc1: contract the S dims of w1 [256, S] and x [bt, S] -> [256, bt].
    # bf16 operands, f32 accumulation (K = state_space pads to the MXU K anyway).
    x = x_ref[...].astype(jnp.bfloat16)
    h = lax.dot_general(w1_ref[...], x, (((1,), (1,)), ((), ())),
                        preferred_element_type=jnp.float32)

    if fast_epilogue:
        # v6e/v7x: the 4 VALU slots are the limiter at large tiles -> bias+relu in
        # packed bf16, and run the 256->1 layer on the idle MXU as a zero-padded
        # [8,256] @ [256,bt] matmul, taking row 0.
        h = jnp.maximum(h.astype(jnp.bfloat16) + b1_ref[...], 0)
        h = jnp.dot(w2_ref[...], h, preferred_element_type=jnp.float32)
        h = jnp.maximum(h.astype(jnp.bfloat16) + b2_ref[...], 0)
        h = jnp.dot(w3_ref[...], h, preferred_element_type=jnp.float32)
        h = jnp.maximum(h.astype(jnp.bfloat16) + b3_ref[...], 0)
        logits = jnp.dot(w4_ref[...], h, preferred_element_type=jnp.float32)
        o_ref[...] = (logits[0:1, :] + b4_ref[0, 0]).astype(o_ref.dtype)
    else:
        # v5e and older: MXU-bound, no bf16 VALU -> keep f32 bias/relu on the VPU
        # and the 256->1 layer as a VPU multiply + cross-sublane (XLU) reduce.
        h = jnp.maximum(h + b1_ref[...], 0.0)
        h = jnp.dot(w2_ref[...], h.astype(jnp.bfloat16),
                    preferred_element_type=jnp.float32)
        h = jnp.maximum(h + b2_ref[...], 0.0)
        h = jnp.dot(w3_ref[...], h.astype(jnp.bfloat16),
                    preferred_element_type=jnp.float32)
        h = jnp.maximum(h + b3_ref[...], 0.0)
        logits = jnp.sum(h * w4_ref[...], axis=0, keepdims=True) + b4_ref[0, 0]
        o_ref[...] = logits.astype(o_ref.dtype)


@functools.partial(jax.jit, static_argnames=("batch_tile", "fast_epilogue"))
def _forward_impl(goal, params, *, batch_tile, fast_epilogue):
    W1, b1, W2, b2, W3, b3, W4, b4 = params
    B, S = goal.shape
    bt = batch_tile if batch_tile is not None else _pick_batch_tile(B)
    n_tiles = pl.cdiv(B, bt)
    B_out = n_tiles * bt   # output is lane-padded; valid logits are [:B]

    # Resident weights in PyTorch [out, in] layout (batch stays on the lane axis).
    w1c = W1.astype(jnp.bfloat16)                        # [256, S]
    w2c = W2.astype(jnp.bfloat16)                        # [256, 256]
    w3c = W3.astype(jnp.bfloat16)                        # [256, 256]
    b4c = b4.reshape(1, 1).astype(jnp.float32)           # scalar -> SMEM
    if fast_epilogue:
        b1c = b1.reshape(HIDDEN, 1).astype(jnp.bfloat16)
        b2c = b2.reshape(HIDDEN, 1).astype(jnp.bfloat16)
        b3c = b3.reshape(HIDDEN, 1).astype(jnp.bfloat16)
        # 256->1 as a zero-padded [8, 256] MXU operand (row 0 = output weights).
        w4c = jnp.zeros((8, HIDDEN), jnp.bfloat16).at[0, :].set(
            W4.reshape(HIDDEN).astype(jnp.bfloat16))
    else:
        b1c = b1.reshape(HIDDEN, 1).astype(jnp.float32)
        b2c = b2.reshape(HIDDEN, 1).astype(jnp.float32)
        b3c = b3.reshape(HIDDEN, 1).astype(jnp.float32)
        w4c = W4.reshape(HIDDEN, 1).astype(jnp.float32)  # [256, 1]

    def rep(arr):  # full-array block; block index never changes -> fetched once
        return pl.BlockSpec(arr.shape, lambda i: (0, 0))

    kernel = functools.partial(_disc_kernel, fast_epilogue=fast_epilogue)

    out_row = pl.pallas_call(
        kernel,
        out_shape=jax.ShapeDtypeStruct((1, B_out), jnp.float32),
        grid_spec=pltpu.PrefetchScalarGridSpec(
            num_scalar_prefetch=0,
            grid=(n_tiles,),
            in_specs=[
                pl.BlockSpec((bt, S), lambda i: (i, 0)),   # untransposed goal tile
                rep(w1c), rep(b1c),
                rep(w2c), rep(b2c),
                rep(w3c), rep(b3c),
                rep(w4c),
                pl.BlockSpec(memory_space=pltpu.MemorySpace.SMEM),  # b4 scalar
            ],
            out_specs=pl.BlockSpec((1, bt), lambda i: (0, i)),      # lane-dense logits
        ),
        compiler_params=pltpu.CompilerParams(
            dimension_semantics=("parallel",),            # megacore-shardable batch axis
            vmem_limit_bytes=32 * 1024 * 1024,            # lifts v5e's 16 MiB default
        ),
    )(goal.astype(jnp.float32), w1c, b1c, w2c, b2c, w3c, b3c, w4c, b4c)

    return out_row[0, :B].reshape(B, 1)


def discriminator_forward(goal, params, *, batch_tile=None, fast_epilogue=None):
    """goal: [B, state_space] -> logits [B, 1] float32 (PyTorch-layout params)."""
    if fast_epilogue is None:
        fast_epilogue = _default_fast_epilogue()
    return _forward_impl(goal, params, batch_tile=batch_tile,
                         fast_epilogue=bool(fast_epilogue))


def init_params(key, state_space=STATE_SPACE, hidden=HIDDEN):
    """PyTorch-nn.Linear-like init, PyTorch layout: W [out, in], b [out]."""
    ks = jax.random.split(key, 8)

    def linear(kw, kb, fan_in, fan_out):
        bound = 1.0 / float(fan_in) ** 0.5
        w = jax.random.uniform(kw, (fan_out, fan_in), jnp.float32, -bound, bound)
        b = jax.random.uniform(kb, (fan_out,), jnp.float32, -bound, bound)
        return w, b

    W1, b1 = linear(ks[0], ks[1], state_space, hidden)
    W2, b2 = linear(ks[2], ks[3], hidden, hidden)
    W3, b3 = linear(ks[4], ks[5], hidden, hidden)
    W4, b4 = linear(ks[6], ks[7], hidden, 1)
    return (W1, b1, W2, b2, W3, b3, W4, b4)


def reference_forward(goal, params):
    """Pure-JAX f32 reference matching the PyTorch module."""
    W1, b1, W2, b2, W3, b3, W4, b4 = params
    h = jax.nn.relu(goal @ W1.T + b1)
    h = jax.nn.relu(h @ W2.T + b2)
    h = jax.nn.relu(h @ W3.T + b3)
    return h @ W4.T + b4


if __name__ == "__main__":
    key = jax.random.PRNGKey(0)
    k_param, k_goal = jax.random.split(key)

    B = 8
    params = init_params(k_param)
    goal = jax.random.normal(k_goal, (B, STATE_SPACE), jnp.float32)

    out = discriminator_forward(goal, params)
    out = jax.block_until_ready(out)

    ref = reference_forward(goal, params)
    assert out.shape == (B, 1), out.shape
    # bf16 MXU operands with f32 accumulation -> small numerical delta vs f32 ref.
    assert jnp.allclose(out, ref, atol=3e-2, rtol=3e-2), (out, ref)

    print("KERNEL_OK")
</pallas_src>

<mosaic_0001>
module attributes {stable_mosaic.version = 11 : i64} {
  func.func @_disc_kernel(%arg0: i32, %arg1: memref<128x8xf32, #tpu.memory_space<vmem>>, %arg2: memref<256x8xbf16, #tpu.memory_space<vmem>>, %arg3: memref<256x1xbf16, #tpu.memory_space<vmem>>, %arg4: memref<256x256xbf16, #tpu.memory_space<vmem>>, %arg5: memref<256x1xbf16, #tpu.memory_space<vmem>>, %arg6: memref<256x256xbf16, #tpu.memory_space<vmem>>, %arg7: memref<256x1xbf16, #tpu.memory_space<vmem>>, %arg8: memref<8x256xbf16, #tpu.memory_space<vmem>>, %arg9: memref<1x1xf32, #tpu.memory_space<smem>>, %arg10: memref<1x128xf32, #tpu.memory_space<vmem>>) attributes {dimension_semantics = [#tpu.dimension_semantics<parallel>], iteration_bounds = array<i64: 1>, scalar_prefetch = 0 : i64, scratch_operands = 0 : i64, tpu.core_type = #tpu.core_type<tc>, window_params = [{transform_indices = @transform_0, window_bounds = array<i64: 128, 8>}, {pipeline_mode = #tpu.pipeline_mode<synchronous>, transform_indices = @transform_1, window_bounds = array<i64: 256, 8>}, {pipeline_mode = #tpu.pipeline_mode<synchronous>, transform_indices = @transform_2, window_bounds = array<i64: 256, 1>}, {pipeline_mode = #tpu.pipeline_mode<synchronous>, transform_indices = @transform_3, window_bounds = array<i64: 256, 256>}, {pipeline_mode = #tpu.pipeline_mode<synchronous>, transform_indices = @transform_4, window_bounds = array<i64: 256, 1>}, {pipeline_mode = #tpu.pipeline_mode<synchronous>, transform_indices = @transform_5, window_bounds = array<i64: 256, 256>}, {pipeline_mode = #tpu.pipeline_mode<synchronous>, transform_indices = @transform_6, window_bounds = array<i64: 256, 1>}, {pipeline_mode = #tpu.pipeline_mode<synchronous>, transform_indices = @transform_7, window_bounds = array<i64: 8, 256>}, {transform_indices = @transform_8, window_bounds = array<i64: 1, 1>}, {transform_indices = @transform_9, window_bounds = array<i64: 1, 128>}]} {
    %c0 = arith.constant 0 : index
    %c0_0 = arith.constant 0 : index
    %0 = vector.load %arg1[%c0, %c0_0] : memref<128x8xf32, #tpu.memory_space<vmem>>, vector<128x8xf32>
    %1 = arith.truncf %0 : vector<128x8xf32> to vector<128x8xbf16>
    %c0_1 = arith.constant 0 : index
    %c0_2 = arith.constant 0 : index
    %2 = vector.load %arg2[%c0_1, %c0_2] : memref<256x8xbf16, #tpu.memory_space<vmem>>, vector<256x8xbf16>
    %cst = arith.constant dense<0.000000e+00> : vector<256x128xf32>
    %3 = tpu.matmul %2, %1, %cst {dimension_numbers = #tpu.dot_dimension_numbers<[1], [1], [0], [0], [0, 0, 1, 0], [], []>} : vector<256x8xbf16>, vector<128x8xbf16>, vector<256x128xf32> -> vector<256x128xf32>
    %4 = arith.truncf %3 : vector<256x128xf32> to vector<256x128xbf16>
    %c0_3 = arith.constant 0 : index
    %c0_4 = arith.constant 0 : index
    %5 = vector.load %arg3[%c0_3, %c0_4] : memref<256x1xbf16, #tpu.memory_space<vmem>>, vector<256x1xbf16>
    %6 = vector.broadcast %5 : vector<256x1xbf16> to vector<256x128xbf16>
    %7 = arith.addf %4, %6 : vector<256x128xbf16>
    %cst_5 = arith.constant 0.000000e+00 : bf16
    %8 = vector.broadcast %cst_5 : bf16 to vector<256x128xbf16>
    %9 = arith.maximumf %7, %8 : vector<256x128xbf16>
    %c0_6 = arith.constant 0 : index
    %c0_7 = arith.constant 0 : index
    %10 = vector.load %arg4[%c0_6, %c0_7] : memref<256x256xbf16, #tpu.memory_space<vmem>>, vector<256x256xbf16>
    %cst_8 = arith.constant dense<0.000000e+00> : vector<256x128xf32>
    %11 = tpu.matmul %10, %9, %cst_8 {dimension_numbers = #tpu.dot_dimension_numbers<[1], [0], [0], [1], [0, 0, 1, 1], [], []>} : vector<256x256xbf16>, vector<256x128xbf16>, vector<256x128xf32> -> vector<256x128xf32>
    %12 = arith.truncf %11 : vector<256x128xf32> to vector<256x128xbf16>
    %c0_9 = arith.constant 0 : index
    %c0_10 = arith.constant 0 : index
    %13 = vector.load %arg5[%c0_9, %c0_10] : memref<256x1xbf16, #tpu.memory_space<vmem>>, vector<256x1xbf16>
    %14 = vector.broadcast %13 : vector<256x1xbf16> to vector<256x128xbf16>
    %15 = arith.addf %12, %14 : vector<256x128xbf16>
    %cst_11 = arith.constant 0.000000e+00 : bf16
    %16 = vector.broadcast %cst_11 : bf16 to vector<256x128xbf16>
    %17 = arith.maximumf %15, %16 : vector<256x128xbf16>
    %c0_12 = arith.constant 0 : index
    %c0_13 = arith.constant 0 : index
    %18 = vector.load %arg6[%c0_12, %c0_13] : memref<256x256xbf16, #tpu.memory_space<vmem>>, vector<256x256xbf16>
    %cst_14 = arith.constant dense<0.000000e+00> : vector<256x128xf32>
    %19 = tpu.matmul %18, %17, %cst_14 {dimension_numbers = #tpu.dot_dimension_numbers<[1], [0], [0], [1], [0, 0, 1, 1], [], []>} : vector<256x256xbf16>, vector<256x128xbf16>, vector<256x128xf32> -> vector<256x128xf32>
    %20 = arith.truncf %19 : vector<256x128xf32> to vector<256x128xbf16>
    %c0_15 = arith.constant 0 : index
    %c0_16 = arith.constant 0 : index
    %21 = vector.load %arg7[%c0_15, %c0_16] : memref<256x1xbf16, #tpu.memory_space<vmem>>, vector<256x1xbf16>
    %22 = vector.broadcast %21 : vector<256x1xbf16> to vector<256x128xbf16>
    %23 = arith.addf %20, %22 : vector<256x128xbf16>
    %cst_17 = arith.constant 0.000000e+00 : bf16
    %24 = vector.broadcast %cst_17 : bf16 to vector<256x128xbf16>
    %25 = arith.maximumf %23, %24 : vector<256x128xbf16>
    %c0_18 = arith.constant 0 : index
    %c0_19 = arith.constant 0 : index
    %26 = vector.load %arg8[%c0_18, %c0_19] : memref<8x256xbf16, #tpu.memory_space<vmem>>, vector<8x256xbf16>
    %cst_20 = arith.constant dense<0.000000e+00> : vector<8x128xf32>
    %27 = tpu.matmul %26, %25, %cst_20 {dimension_numbers = #tpu.dot_dimension_numbers<[1], [0], [0], [1], [0, 0, 1, 1], [], []>} : vector<8x256xbf16>, vector<256x128xbf16>, vector<8x128xf32> -> vector<8x128xf32>
    %28 = vector.extract_strided_slice %27 {offsets = [0, 0], sizes = [1, 128], strides = [1, 1]} : vector<8x128xf32> to vector<1x128xf32>
    %c0_21 = arith.constant 0 : index
    %c0_22 = arith.constant 0 : index
    %29 = memref.load %arg9[%c0_21, %c0_22] : memref<1x1xf32, #tpu.memory_space<smem>>
    %30 = vector.broadcast %29 : f32 to vector<1x128xf32>
    %31 = arith.addf %28, %30 : vector<1x128xf32>
    %c0_23 = arith.constant 0 : index
    %c0_24 = arith.constant 0 : index
    %32 = vector.load %arg10[%c0_23, %c0_24] : memref<1x128xf32, #tpu.memory_space<vmem>>, vector<1x128xf32>
    tpu.vector_store %arg10[%c0_23, %c0_24], %31 {strides = array<i32>} : memref<1x128xf32, #tpu.memory_space<vmem>>, vector<1x128xf32>,
    return
  }
  func.func @transform_0(%arg0: i32) -> (i32, i32) {
    %c0_i32 = arith.constant 0 : i32
    %c0_i32_0 = arith.constant 0 : i32
    return %arg0, %c0_i32 : i32, i32
  }
  func.func @transform_1(%arg0: i32) -> (i32, i32) {
    %c0_i32 = arith.constant 0 : i32
    %c0_i32_0 = arith.constant 0 : i32
    %c0_i32_1 = arith.constant 0 : i32
    return %c0_i32, %c0_i32_0 : i32, i32
  }
  func.func @transform_2(%arg0: i32) -> (i32, i32) {
    %c0_i32 = arith.constant 0 : i32
    %c0_i32_0 = arith.constant 0 : i32
    %c0_i32_1 = arith.constant 0 : i32
    return %c0_i32, %c0_i32_0 : i32, i32
  }
  func.func @transform_3(%arg0: i32) -> (i32, i32) {
    %c0_i32 = arith.constant 0 : i32
    %c0_i32_0 = arith.constant 0 : i32
    %c0_i32_1 = arith.constant 0 : i32
    return %c0_i32, %c0_i32_0 : i32, i32
  }
  func.func @transform_4(%arg0: i32) -> (i32, i32) {
    %c0_i32 = arith.constant 0 : i32
    %c0_i32_0 = arith.constant 0 : i32
    %c0_i32_1 = arith.constant 0 : i32
    return %c0_i32, %c0_i32_0 : i32, i32
  }
  func.func @transform_5(%arg0: i32) -> (i32, i32) {
    %c0_i32 = arith.constant 0 : i32
    %c0_i32_0 = arith.constant 0 : i32
    %c0_i32_1 = arith.constant 0 : i32
    return %c0_i32, %c0_i32_0 : i32, i32
  }
  func.func @transform_6(%arg0: i32) -> (i32, i32) {
    %c0_i32 = arith.constant 0 : i32
    %c0_i32_0 = arith.constant 0 : i32
    %c0_i32_1 = arith.constant 0 : i32
    return %c0_i32, %c0_i32_0 : i32, i32
  }
  func.func @transform_7(%arg0: i32) -> (i32, i32) {
    %c0_i32 = arith.constant 0 : i32
    %c0_i32_0 = arith.constant 0 : i32
    %c0_i32_1 = arith.constant 0 : i32
    return %c0_i32, %c0_i32_0 : i32, i32
  }
  func.func @transform_8(%arg0: i32) -> (i32, i32) {
    %c0_i32 = arith.constant 0 : i32
    %c0_i32_0 = arith.constant 0 : i32
    %c0_i32_1 = arith.constant 0 : i32
    return %c0_i32, %c0_i32_0 : i32, i32
  }
  func.func @transform_9(%arg0: i32) -> (i32, i32) {
    %c0_i32 = arith.constant 0 : i32
    %c0_i32_0 = arith.constant 0 : i32
    return %c0_i32, %arg0 : i32, i32
  }
}

</mosaic_0001>

<llo_original>
// kernel: _forward_impl.1
$region0: #{_forward_impl.1}
  #allocation0 [shape = 'u32[]', space=smem, size = 0x4, offset = 0x4, fixed_abs, tag = 'smem constant byte address 0x4 - core index']
  #allocation1 [shape = 'u32[144,128]{1,0:T(1,128)}', space=vmem, size = 0x12000, scoped, tag = 'internal scratch']
  #allocation2 [shape = 'f32[1,1]{1,0:T(1,128)S(6)}', space=smem, size = 0x200, scoped, tag = 'scoped memory for _forward_impl.1']
  %s0 = inlined_call_operand.vmem [shape: f32[8,8], index: 0, kind: input, shape index: {}]
  %s1 = inlined_call_operand.vmem [shape: bf16[256,8], index: 1, kind: input, shape index: {}]
  %s2 = inlined_call_operand.vmem [shape: bf16[256,1], index: 2, kind: input, shape index: {}]
  %s3 = inlined_call_operand.vmem [shape: bf16[256,256], index: 3, kind: input, shape index: {}]
  %s4 = inlined_call_operand.vmem [shape: bf16[256,1], index: 4, kind: input, shape index: {}]
  %s5 = inlined_call_operand.vmem [shape: bf16[256,256], index: 5, kind: input, shape index: {}]
  %s6 = inlined_call_operand.vmem [shape: bf16[256,1], index: 6, kind: input, shape index: {}]
  %s7 = inlined_call_operand.vmem [shape: bf16[8,256], index: 7, kind: input, shape index: {}]
  %s8 = inlined_call_operand.<no memory space> [shape: f32[1,1], index: 8, kind: input, shape index: {}]
  %s9 = inlined_call_operand.vmem [shape: f32[1,128], index: 9, kind: output, shape index: {}]
  %s10 = sld [smem:[#allocation0]]
  $region46: #{_forward_impl.1} parent=0
    _
  %s12 = ssub.s32 1, %s10
  %s13 = scalar_select 0, %s12, %s10
  %14 = sst [smem:[#allocation2]] %s8
  // Predicated region
  $region2: #{_forward_impl.1} parent=0 // pred_check
    _
  $region3: #{_forward_impl.1} parent=0 // pred_check_branch
    %16 = sbr.rel (0) target = $region5
  $region4: #{_forward_impl.1} parent=0 // pred_region
    _
  $region5: #{_forward_impl.1} parent=0 // pred_fallthru
    _
  // Predicated region
  $region6: #{_forward_impl.1} parent=0 // pred_check
    _
  $region7: #{_forward_impl.1} parent=0 // pred_check_branch
    %18 = sbr.rel (0) target = $region9
  $region8: #{_forward_impl.1} parent=0 // pred_region
    _
  $region9: #{_forward_impl.1} parent=0 // pred_fallthru
    _
  // Predicated region
  $region10: #{_forward_impl.1} parent=0 // pred_check
    _
  $region11: #{_forward_impl.1} parent=0 // pred_check_branch
    %20 = sbr.rel (0) target = $region13
  $region12: #{_forward_impl.1} parent=0 // pred_region
    _
  $region13: #{_forward_impl.1} parent=0 // pred_fallthru
    _
  // Predicated region
  $region14: #{_forward_impl.1} parent=0 // pred_check
    _
  $region15: #{_forward_impl.1} parent=0 // pred_check_branch
    %22 = sbr.rel (0) target = $region17
  $region16: #{_forward_impl.1} parent=0 // pred_region
    _
  $region17: #{_forward_impl.1} parent=0 // pred_fallthru
    _
  // Predicated region
  $region18: #{_forward_impl.1} parent=0 // pred_check
    _
  $region19: #{_forward_impl.1} parent=0 // pred_check_branch
    %24 = sbr.rel (0) target = $region21
  $region20: #{_forward_impl.1} parent=0 // pred_region
    _
  $region21: #{_forward_impl.1} parent=0 // pred_fallthru
    _
  // Predicated region
  $region22: #{_forward_impl.1} parent=0 // pred_check
    _
  $region23: #{_forward_impl.1} parent=0 // pred_check_branch
    %26 = sbr.rel (0) target = $region25
  $region24: #{_forward_impl.1} parent=0 // pred_region
    _
  $region25: #{_forward_impl.1} parent=0 // pred_fallthru
    _
  // Predicated region
  $region26: #{_forward_impl.1} parent=0 // pred_check
    _
  $region27: #{_forward_impl.1} parent=0 // pred_check_branch
    %28 = sbr.rel (0) target = $region29
  $region28: #{_forward_impl.1} parent=0 // pred_region
    _
  $region29: #{_forward_impl.1} parent=0 // pred_fallthru
    _
  // Predicated region
  $region30: #{_forward_impl.1} parent=0 // pred_check
    _
  $region31: #{_forward_impl.1} parent=0 // pred_check_branch
    %30 = sbr.rel (0) target = $region33
  $region32: #{_forward_impl.1} parent=0 // pred_region
    _
  $region33: #{_forward_impl.1} parent=0 // pred_fallthru
    _
  // Predicated region
  $region34: #{_forward_impl.1} parent=0 // pred_check
    _
  $region35: #{_forward_impl.1} parent=0 // pred_check_branch
    %32 = sbr.rel (0) target = $region37
  $region36: #{_forward_impl.1} parent=0 // pred_region
    _
  $region37: #{_forward_impl.1} parent=0 // pred_fallthru
    _
  %v34 = vld [vmem:[%s0] sm:$0xff]
  %v35 = vld [vmem:[%s0 + $0x8] sm:$0xff]
  %v36 = vld [vmem:[%s0 + $0x10] sm:$0xff]
  %v37 = vld [vmem:[%s0 + $0x18] sm:$0xff]
  %v38 = vld [vmem:[%s0 + $0x20] sm:$0xff]
  %v39 = vld [vmem:[%s0 + $0x28] sm:$0xff]
  %v40 = vld [vmem:[%s0 + $0x30] sm:$0xff]
  %v41 = vld [vmem:[%s0 + $0x38] sm:$0xff]
  %v42 = vld [vmem:[%s0 + $0x40] sm:$0xff]
  %v43 = vld [vmem:[%s0 + $0x48] sm:$0xff]
  %v44 = vld [vmem:[%s0 + $0x50] sm:$0xff]
  %v45 = vld [vmem:[%s0 + $0x58] sm:$0xff]
  %v46 = vld [vmem:[%s0 + $0x60] sm:$0xff]
  %v47 = vld [vmem:[%s0 + $0x68] sm:$0xff]
  %v48 = vld [vmem:[%s0 + $0x70] sm:$0xff]
  %v49 = vld [vmem:[%s0 + $0x78] sm:$0xff]
  %v50 = vpack.c.bf16 %v35, %v34
  %v51 = vpack.c.bf16 %v37, %v36
  %v52 = vpack.c.bf16 %v39, %v38
  %v53 = vpack.c.bf16 %v41, %v40
  %v54 = vpack.c.bf16 %v43, %v42
  %v55 = vpack.c.bf16 %v45, %v44
  %v56 = vpack.c.bf16 %v47, %v46
  %v57 = vpack.c.bf16 %v49, %v48
  %v58 = vld [vmem:[%s1] sm:$0xf]
  %v59 = vld [vmem:[%s1 + $0x4] sm:$0xf]
  %v60 = vld [vmem:[%s1 + $0x8] sm:$0xf]
  %v61 = vld [vmem:[%s1 + $0xc] sm:$0xf]
  %v62 = vld [vmem:[%s1 + $0x10] sm:$0xf]
  %v63 = vld [vmem:[%s1 + $0x14] sm:$0xf]
  %v64 = vld [vmem:[%s1 + $0x18] sm:$0xf]
  %v65 = vld [vmem:[%s1 + $0x1c] sm:$0xf]
  %v66 = vld [vmem:[%s1 + $0x20] sm:$0xf]
  %v67 = vld [vmem:[%s1 + $0x24] sm:$0xf]
  %v68 = vld [vmem:[%s1 + $0x28] sm:$0xf]
  %v69 = vld [vmem:[%s1 + $0x2c] sm:$0xf]
  %v70 = vld [vmem:[%s1 + $0x30] sm:$0xf]
  %v71 = vld [vmem:[%s1 + $0x34] sm:$0xf]
  %v72 = vld [vmem:[%s1 + $0x38] sm:$0xf]
  %v73 = vld [vmem:[%s1 + $0x3c] sm:$0xf]
  %v74 = vld [vmem:[%s1 + $0x40] sm:$0xf]
  %v75 = vld [vmem:[%s1 + $0x44] sm:$0xf]
  %v76 = vld [vmem:[%s1 + $0x48] sm:$0xf]
  %v77 = vld [vmem:[%s1 + $0x4c] sm:$0xf]
  %v78 = vld [vmem:[%s1 + $0x50] sm:$0xf]
  %v79 = vld [vmem:[%s1 + $0x54] sm:$0xf]
  %v80 = vld [vmem:[%s1 + $0x58] sm:$0xf]
  %v81 = vld [vmem:[%s1 + $0x5c] sm:$0xf]
  %v82 = vld [vmem:[%s1 + $0x60] sm:$0xf]
  %v83 = vld [vmem:[%s1 + $0x64] sm:$0xf]
  %v84 = vld [vmem:[%s1 + $0x68] sm:$0xf]
  %v85 = vld [vmem:[%s1 + $0x6c] sm:$0xf]
  %v86 = vld [vmem:[%s1 + $0x70] sm:$0xf]
  %v87 = vld [vmem:[%s1 + $0x74] sm:$0xf]
  %v88 = vld [vmem:[%s1 + $0x78] sm:$0xf]
  %v89 = vld [vmem:[%s1 + $0x7c] sm:$0xf]
  %v122 = vunpack.c.l.b16 %v58
  %v123 = vunpack.c.l.b16 %v59
  %v124 = vunpack.c.l.b16 %v60
  %v125 = vunpack.c.l.b16 %v61
  %v126 = vunpack.c.l.b16 %v62
  %v127 = vunpack.c.l.b16 %v63
  %v128 = vunpack.c.l.b16 %v64
  %v129 = vunpack.c.l.b16 %v65
  %v130 = vunpack.c.l.b16 %v66
  %v131 = vunpack.c.l.b16 %v67
  %v132 = vunpack.c.l.b16 %v68
  %v133 = vunpack.c.l.b16 %v69
  %v134 = vunpack.c.l.b16 %v70
  %v135 = vunpack.c.l.b16 %v71
  %v136 = vunpack.c.l.b16 %v72
  %v137 = vunpack.c.l.b16 %v73
  %v138 = vunpack.c.l.b16 %v74
  %v139 = vunpack.c.l.b16 %v75
  %v140 = vunpack.c.l.b16 %v76
  %v141 = vunpack.c.l.b16 %v77
  %v142 = vunpack.c.l.b16 %v78
  %v143 = vunpack.c.l.b16 %v79
  %v144 = vunpack.c.l.b16 %v80
  %v145 = vunpack.c.l.b16 %v81
  %v146 = vunpack.c.l.b16 %v82
  %v147 = vunpack.c.l.b16 %v83
  %v148 = vunpack.c.l.b16 %v84
  %v149 = vunpack.c.l.b16 %v85
  %v150 = vunpack.c.l.b16 %v86
  %v151 = vunpack.c.l.b16 %v87
  %v152 = vunpack.c.l.b16 %v88
  %v153 = vunpack.c.l.b16 %v89
  %v154 = vpack.c.b16 %v123, %v122
  %v155 = vpack.c.b16 %v125, %v124
  %v156 = vpack.c.b16 %v127, %v126
  %v157 = vpack.c.b16 %v129, %v128
  %v158 = vpack.c.b16 %v131, %v130
  %v159 = vpack.c.b16 %v133, %v132
  %v160 = vpack.c.b16 %v135, %v134
  %v161 = vpack.c.b16 %v137, %v136
  %v162 = vpack.c.b16 %v139, %v138
  %v163 = vpack.c.b16 %v141, %v140
  %v164 = vpack.c.b16 %v143, %v142
  %v165 = vpack.c.b16 %v145, %v144
  %v166 = vpack.c.b16 %v147, %v146
  %v167 = vpack.c.b16 %v149, %v148
  %v168 = vpack.c.b16 %v151, %v150
  %v169 = vpack.c.b16 %v153, %v152
  %vm170 = vcmask 64512
  %v172 = vsel %vm170, %v154, 0
  %v175 = vsel %vm170, %v155, 0
  %v178 = vsel %vm170, %v156, 0
  %v181 = vsel %vm170, %v157, 0
  %v184 = vsel %vm170, %v158, 0
  %v187 = vsel %vm170, %v159, 0
  %v190 = vsel %vm170, %v160, 0
  %v193 = vsel %vm170, %v161, 0
  %v196 = vsel %vm170, %v162, 0
  %v199 = vsel %vm170, %v163, 0
  %v202 = vsel %vm170, %v164, 0
  %v205 = vsel %vm170, %v165, 0
  %v208 = vsel %vm170, %v166, 0
  %v211 = vsel %vm170, %v167, 0
  %v214 = vsel %vm170, %v168, 0
  %v217 = vsel %vm170, %v169, 0
  %v220 = vsel %vm170, %v50, 0
  %v223 = vsel %vm170, %v51, 0
  %v226 = vsel %vm170, %v52, 0
  %v229 = vsel %vm170, %v53, 0
  %v232 = vsel %vm170, %v54, 0
  %v235 = vsel %vm170, %v55, 0
  %v238 = vsel %vm170, %v56, 0
  %v241 = vsel %vm170, %v57, 0
  %243 = vmatprep.subr.bf16.mxu0 0
  %244 = vmatpush1.bf16.xpose.msra.mxu0 %v220
  %245 = vmatprep.subr.bf16.mxu0 0
  %246 = vmatpush1.bf16.xpose.msra.mxu0 %v223
  %247 = vmatprep.subr.bf16.mxu0 0
  %248 = vmatpush1.bf16.xpose.msra.mxu0 %v226
  %249 = vmatprep.subr.bf16.mxu0 0
  %250 = vmatpush1.bf16.xpose.msra.mxu0 %v229
  %251 = vmatprep.subr.bf16.mxu0 0
  %252 = vmatpush1.bf16.xpose.msra.mxu0 %v232
  %253 = vmatprep.subr.bf16.mxu0 0
  %254 = vmatpush1.bf16.xpose.msra.mxu0 %v235
  %255 = vmatprep.subr.bf16.mxu0 0
  %256 = vmatpush1.bf16.xpose.msra.mxu0 %v238
  %257 = vmatprep.subr.bf16.mxu0 0
  %258 = vmatpush1.bf16.xpose.msra.mxu0 %v241
  %259 = vmatprep.subr.bf16.mxu0 0
  %260 = vmatpush1.bf16.xpose.msra.mxu0 0
  %261 = vmatprep.subr.bf16.mxu0 0
  %262 = vmatpush1.bf16.xpose.msra.mxu0 0
  %263 = vmatprep.subr.bf16.mxu0 0
  %264 = vmatpush1.bf16.xpose.msra.mxu0 0
  %265 = vmatprep.subr.bf16.mxu0 0
  %266 = vmatpush1.bf16.xpose.msra.mxu0 0
  %267 = vmatprep.subr.bf16.mxu0 0
  %268 = vmatpush1.bf16.xpose.msra.mxu0 0
  %269 = vmatprep.subr.bf16.mxu0 0
  %270 = vmatpush1.bf16.xpose.msra.mxu0 0
  %271 = vmatprep.subr.bf16.mxu0 0
  %272 = vmatpush1.bf16.xpose.msra.mxu0 0
  %273 = vmatprep.subr.bf16.mxu0 0
  %274 = vmatpush1.bf16.xpose.msra.mxu0 0
  %275 = vmatprep.mubr.bf16.mxu0 0
  %276 = vmatmul.mubr.bf16.gmra.mrb[0].mxu0 %v172
  %v277 = vpop.f32.mrb[0].mxu0
  %v278 = vadd.f32 0.0, %v277
  %v279 = vpop.f32.mrb[0].mxu0
  %v280 = vpop.f32.mrb[0].mxu0
  %v281 = vadd.f32 0.0, %v280
  %v282 = vpop.f32.mrb[0].mxu0
  %283 = vmatprep.mubr.bf16.mxu0 0
  %284 = vmatmul.mubr.bf16.gmra.mrb[0].mxu0 %v175
  %v285 = vpop.f32.mrb[0].mxu0
  %v286 = vadd.f32 0.0, %v285
  %v287 = vpop.f32.mrb[0].mxu0
  %v288 = vpop.f32.mrb[0].mxu0
  %v289 = vadd.f32 0.0, %v288
  %v290 = vpop.f32.mrb[0].mxu0
  %291 = vmatprep.mubr.bf16.mxu0 0
  %292 = vmatmul.mubr.bf16.gmra.mrb[0].mxu0 %v178
  %v293 = vpop.f32.mrb[0].mxu0
  %v294 = vadd.f32 0.0, %v293
  %v295 = vpop.f32.mrb[0].mxu0
  %v296 = vpop.f32.mrb[0].mxu0
  %v297 = vadd.f32 0.0, %v296
  %v298 = vpop.f32.mrb[0].mxu0
  %299 = vmatprep.mubr.bf16.mxu0 0
  %300 = vmatmul.mubr.bf16.gmra.mrb[0].mxu0 %v181
  %v301 = vpop.f32.mrb[0].mxu0
  %v302 = vadd.f32 0.0, %v301
  %v303 = vpop.f32.mrb[0].mxu0
  %v304 = vpop.f32.mrb[0].mxu0
  %v305 = vadd.f32 0.0, %v304
  %v306 = vpop.f32.mrb[0].mxu0
  %307 = vmatprep.mubr.bf16.mxu0 0
  %308 = vmatmul.mubr.bf16.gmra.mrb[0].mxu0 %v184
  %v309 = vpop.f32.mrb[0].mxu0
  %v310 = vadd.f32 0.0, %v309
  %v311 = vpop.f32.mrb[0].mxu0
  %v312 = vpop.f32.mrb[0].mxu0
  %v313 = vadd.f32 0.0, %v312
  %v314 = vpop.f32.mrb[0].mxu0
  %315 = vmatprep.mubr.bf16.mxu0 0
  %316 = vmatmul.mubr.bf16.gmra.mrb[0].mxu0 %v187
  %v317 = vpop.f32.mrb[0].mxu0
  %v318 = vadd.f32 0.0, %v317
  %v319 = vpop.f32.mrb[0].mxu0
  %v320 = vpop.f32.mrb[0].mxu0
  %v321 = vadd.f32 0.0, %v320
  %v322 = vpop.f32.mrb[0].mxu0
  %323 = vmatprep.mubr.bf16.mxu0 0
  %324 = vmatmul.mubr.bf16.gmra.mrb[0].mxu0 %v190
  %v325 = vpop.f32.mrb[0].mxu0
  %v326 = vadd.f32 0.0, %v325
  %v327 = vpop.f32.mrb[0].mxu0
  %v328 = vpop.f32.mrb[0].mxu0
  %v329 = vadd.f32 0.0, %v328
  %v330 = vpop.f32.mrb[0].mxu0
  %331 = vmatprep.mubr.bf16.mxu0 0
  %332 = vmatmul.mubr.bf16.gmra.mrb[0].mxu0 %v193
  %v333 = vpop.f32.mrb[0].mxu0
  %v334 = vadd.f32 0.0, %v333
  %v335 = vpop.f32.mrb[0].mxu0
  %v336 = vpop.f32.mrb[0].mxu0
  %v337 = vadd.f32 0.0, %v336
  %v338 = vpop.f32.mrb[0].mxu0
  %339 = vmatprep.mubr.bf16.mxu0 0
  %340 = vmatmul.mubr.bf16.gmra.mrb[0].mxu0 %v196
  %v341 = vpop.f32.mrb[0].mxu0
  %v342 = vadd.f32 0.0, %v341
  %v343 = vpop.f32.mrb[0].mxu0
  %v344 = vpop.f32.mrb[0].mxu0
  %v345 = vadd.f32 0.0, %v344
  %v346 = vpop.f32.mrb[0].mxu0
  %347 = vmatprep.mubr.bf16.mxu0 0
  %348 = vmatmul.mubr.bf16.gmra.mrb[0].mxu0 %v199
  %v349 = vpop.f32.mrb[0].mxu0
  %v350 = vadd.f32 0.0, %v349
  %v351 = vpop.f32.mrb[0].mxu0
  %v352 = vpop.f32.mrb[0].mxu0
  %v353 = vadd.f32 0.0, %v352
  %v354 = vpop.f32.mrb[0].mxu0
  %355 = vmatprep.mubr.bf16.mxu0 0
  %356 = vmatmul.mubr.bf16.gmra.mrb[0].mxu0 %v202
  %v357 = vpop.f32.mrb[0].mxu0
  %v358 = vadd.f32 0.0, %v357
  %v359 = vpop.f32.mrb[0].mxu0
  %v360 = vpop.f32.mrb[0].mxu0
  %v361 = vadd.f32 0.0, %v360
  %v362 = vpop.f32.mrb[0].mxu0
  %363 = vmatprep.mubr.bf16.mxu0 0
  %364 = vmatmul.mubr.bf16.gmra.mrb[0].mxu0 %v205
  %v365 = vpop.f32.mrb[0].mxu0
  %v366 = vadd.f32 0.0, %v365
  %v367 = vpop.f32.mrb[0].mxu0
  %v368 = vpop.f32.mrb[0].mxu0
  %v369 = vadd.f32 0.0, %v368
  %v370 = vpop.f32.mrb[0].mxu0
  %371 = vmatprep.mubr.bf16.mxu0 0
  %372 = vmatmul.mubr.bf16.gmra.mrb[0].mxu0 %v208
  %v373 = vpop.f32.mrb[0].mxu0
  %v374 = vadd.f32 0.0, %v373
  %v375 = vpop.f32.mrb[0].mxu0
  %v376 = vpop.f32.mrb[0].mxu0
  %v377 = vadd.f32 0.0, %v376
  %v378 = vpop.f32.mrb[0].mxu0
  %379 = vmatprep.mubr.bf16.mxu0 0
  %380 = vmatmul.mubr.bf16.gmra.mrb[0].mxu0 %v211
  %v381 = vpop.f32.mrb[0].mxu0
  %v382 = vadd.f32 0.0, %v381
  %v383 = vpop.f32.mrb[0].mxu0
  %v384 = vpop.f32.mrb[0].mxu0
  %v385 = vadd.f32 0.0, %v384
  %v386 = vpop.f32.mrb[0].mxu0
  %387 = vmatprep.mubr.bf16.mxu0 0
  %388 = vmatmul.mubr.bf16.gmra.mrb[0].mxu0 %v214
  %v389 = vpop.f32.mrb[0].mxu0
  %v390 = vadd.f32 0.0, %v389
  %v391 = vpop.f32.mrb[0].mxu0
  %v392 = vpop.f32.mrb[0].mxu0
  %v393 = vadd.f32 0.0, %v392
  %v394 = vpop.f32.mrb[0].mxu0
  %395 = vmatprep.mubr.bf16.mxu0 0
  %396 = vmatmul.mubr.bf16.gmra.mrb[0].mxu0 %v217
  %v397 = vpop.f32.mrb[0].mxu0
  %v398 = vadd.f32 0.0, %v397
  %v399 = vpop.f32.mrb[0].mxu0
  %v400 = vpop.f32.mrb[0].mxu0
  %v401 = vadd.f32 0.0, %v400
  %v402 = vpop.f32.mrb[0].mxu0
  %403 = vdwg.mxu0
  %v404 = vpack.c.bf16 %v281, %v278
  %v405 = vpack.c.bf16 %v289, %v286
  %v406 = vpack.c.bf16 %v297, %v294
  %v407 = vpack.c.bf16 %v305, %v302
  %v408 = vpack.c.bf16 %v313, %v310
  %v409 = vpack.c.bf16 %v321, %v318
  %v410 = vpack.c.bf16 %v329, %v326
  %v411 = vpack.c.bf16 %v337, %v334
  %v412 = vpack.c.bf16 %v345, %v342
  %v413 = vpack.c.bf16 %v353, %v350
  %v414 = vpack.c.bf16 %v361, %v358
  %v415 = vpack.c.bf16 %v369, %v366
  %v416 = vpack.c.bf16 %v377, %v374
  %v417 = vpack.c.bf16 %v385, %v382
  %v418 = vpack.c.bf16 %v393, %v390
  %v419 = vpack.c.bf16 %v401, %v398
  %v420 = vld [vmem:[%s2] sm:$0xf]
  %v421 = vld [vmem:[%s2 + $0x4] sm:$0xf]
  %v422 = vld [vmem:[%s2 + $0x8] sm:$0xf]
  %v423 = vld [vmem:[%s2 + $0xc] sm:$0xf]
  %v424 = vld [vmem:[%s2 + $0x10] sm:$0xf]
  %v425 = vld [vmem:[%s2 + $0x14] sm:$0xf]
  %v426 = vld [vmem:[%s2 + $0x18] sm:$0xf]
  %v427 = vld [vmem:[%s2 + $0x1c] sm:$0xf]
  %v428 = vld [vmem:[%s2 + $0x20] sm:$0xf]
  %v429 = vld [vmem:[%s2 + $0x24] sm:$0xf]
  %v430 = vld [vmem:[%s2 + $0x28] sm:$0xf]
  %v431 = vld [vmem:[%s2 + $0x2c] sm:$0xf]
  %v432 = vld [vmem:[%s2 + $0x30] sm:$0xf]
  %v433 = vld [vmem:[%s2 + $0x34] sm:$0xf]
  %v434 = vld [vmem:[%s2 + $0x38] sm:$0xf]
  %v435 = vld [vmem:[%s2 + $0x3c] sm:$0xf]
  %v436 = vld [vmem:[%s2 + $0x40] sm:$0xf]
  %v437 = vld [vmem:[%s2 + $0x44] sm:$0xf]
  %v438 = vld [vmem:[%s2 + $0x48] sm:$0xf]
  %v439 = vld [vmem:[%s2 + $0x4c] sm:$0xf]
  %v440 = vld [vmem:[%s2 + $0x50] sm:$0xf]
  %v441 = vld [vmem:[%s2 + $0x54] sm:$0xf]
  %v442 = vld [vmem:[%s2 + $0x58] sm:$0xf]
  %v443 = vld [vmem:[%s2 + $0x5c] sm:$0xf]
  %v444 = vld [vmem:[%s2 + $0x60] sm:$0xf]
  %v445 = vld [vmem:[%s2 + $0x64] sm:$0xf]
  %v446 = vld [vmem:[%s2 + $0x68] sm:$0xf]
  %v447 = vld [vmem:[%s2 + $0x6c] sm:$0xf]
  %v448 = vld [vmem:[%s2 + $0x70] sm:$0xf]
  %v449 = vld [vmem:[%s2 + $0x74] sm:$0xf]
  %v450 = vld [vmem:[%s2 + $0x78] sm:$0xf]
  %v451 = vld [vmem:[%s2 + $0x7c] sm:$0xf]
  %453 = vset.pattern.permute.xlu0 0
  %454 = vperm.xlu0 %453, %v420
  %v455 = vpop.permute.xlu0 %454
  %v458 = vunpack.c.l.s4 839922192
  %v459 = vunpack.c.0.s8 %v458
  %v460 = vlaneseq
  %v461 = vshrl.u32 %v460, 7
  %v462 = vsub.s32 %v459, %v461
  %v463 = vrot.slane %v455, %v462
  %465 = vset.pattern.permute.xlu0 0
  %466 = vperm.xlu0 %465, %v421
  %v467 = vpop.permute.xlu0 %466
  %v470 = vunpack.c.l.s4 839922192
  %v471 = vunpack.c.0.s8 %v470
  %v472 = vlaneseq
  %v473 = vshrl.u32 %v472, 7
  %v474 = vsub.s32 %v471, %v473
  %v475 = vrot.slane %v467, %v474
  %477 = vset.pattern.permute.xlu0 0
  %478 = vperm.xlu0 %477, %v422
  %v479 = vpop.permute.xlu0 %478
  %v482 = vunpack.c.l.s4 839922192
  %v483 = vunpack.c.0.s8 %v482
  %v484 = vlaneseq
  %v485 = vshrl.u32 %v484, 7
  %v486 = vsub.s32 %v483, %v485
  %v487 = vrot.slane %v479, %v486
  %489 = vset.pattern.permute.xlu0 0
  %490 = vperm.xlu0 %489, %v423
  %v491 = vpop.permute.xlu0 %490
  %v494 = vunpack.c.l.s4 839922192
  %v495 = vunpack.c.0.s8 %v494
  %v496 = vlaneseq
  %v497 = vshrl.u32 %v496, 7
  %v498 = vsub.s32 %v495, %v497
  %v499 = vrot.slane %v491, %v498
  %501 = vset.pattern.permute.xlu0 0
  %502 = vperm.xlu0 %501, %v424
  %v503 = vpop.permute.xlu0 %502
  %v506 = vunpack.c.l.s4 839922192
  %v507 = vunpack.c.0.s8 %v506
  %v508 = vlaneseq
  %v509 = vshrl.u32 %v508, 7
  %v510 = vsub.s32 %v507, %v509
  %v511 = vrot.slane %v503, %v510
  %513 = vset.pattern.permute.xlu0 0
  %514 = vperm.xlu0 %513, %v425
  %v515 = vpop.permute.xlu0 %514
  %v518 = vunpack.c.l.s4 839922192
  %v519 = vunpack.c.0.s8 %v518
  %v520 = vlaneseq
  %v521 = vshrl.u32 %v520, 7
  %v522 = vsub.s32 %v519, %v521
  %v523 = vrot.slane %v515, %v522
  %525 = vset.pattern.permute.xlu0 0
  %526 = vperm.xlu0 %525, %v426
  %v527 = vpop.permute.xlu0 %526
  %v530 = vunpack.c.l.s4 839922192
  %v531 = vunpack.c.0.s8 %v530
  %v532 = vlaneseq
  %v533 = vshrl.u32 %v532, 7
  %v534 = vsub.s32 %v531, %v533
  %v535 = vrot.slane %v527, %v534
  %537 = vset.pattern.permute.xlu0 0
  %538 = vperm.xlu0 %537, %v427
  %v539 = vpop.permute.xlu0 %538
  %v542 = vunpack.c.l.s4 839922192
  %v543 = vunpack.c.0.s8 %v542
  %v544 = vlaneseq
  %v545 = vshrl.u32 %v544, 7
  %v546 = vsub.s32 %v543, %v545
  %v547 = vrot.slane %v539, %v546
  %549 = vset.pattern.permute.xlu0 0
  %550 = vperm.xlu0 %549, %v428
  %v551 = vpop.permute.xlu0 %550
  %v554 = vunpack.c.l.s4 839922192
  %v555 = vunpack.c.0.s8 %v554
  %v556 = vlaneseq
  %v557 = vshrl.u32 %v556, 7
  %v558 = vsub.s32 %v555, %v557
  %v559 = vrot.slane %v551, %v558
  %561 = vset.pattern.permute.xlu0 0
  %562 = vperm.xlu0 %561, %v429
  %v563 = vpop.permute.xlu0 %562
  %v566 = vunpack.c.l.s4 839922192
  %v567 = vunpack.c.0.s8 %v566
  %v568 = vlaneseq
  %v569 = vshrl.u32 %v568, 7
  %v570 = vsub.s32 %v567, %v569
  %v571 = vrot.slane %v563, %v570
  %573 = vset.pattern.permute.xlu0 0
  %574 = vperm.xlu0 %573, %v430
  %v575 = vpop.permute.xlu0 %574
  %v578 = vunpack.c.l.s4 839922192
  %v579 = vunpack.c.0.s8 %v578
  %v580 = vlaneseq
  %v581 = vshrl.u32 %v580, 7
  %v582 = vsub.s32 %v579, %v581
  %v583 = vrot.slane %v575, %v582
  %585 = vset.pattern.permute.xlu0 0
  %586 = vperm.xlu0 %585, %v431
  %v587 = vpop.permute.xlu0 %586
  %v590 = vunpack.c.l.s4 839922192
  %v591 = vunpack.c.0.s8 %v590
  %v592 = vlaneseq
  %v593 = vshrl.u32 %v592, 7
  %v594 = vsub.s32 %v591, %v593
  %v595 = vrot.slane %v587, %v594
  %597 = vset.pattern.permute.xlu0 0
  %598 = vperm.xlu0 %597, %v432
  %v599 = vpop.permute.xlu0 %598
  %v602 = vunpack.c.l.s4 839922192
  %v603 = vunpack.c.0.s8 %v602
  %v604 = vlaneseq
  %v605 = vshrl.u32 %v604, 7
  %v606 = vsub.s32 %v603, %v605
  %v607 = vrot.slane %v599, %v606
  %609 = vset.pattern.permute.xlu0 0
  %610 = vperm.xlu0 %609, %v433
  %v611 = vpop.permute.xlu0 %610
  %v614 = vunpack.c.l.s4 839922192
  %v615 = vunpack.c.0.s8 %v614
  %v616 = vlaneseq
  %v617 = vshrl.u32 %v616, 7
  %v618 = vsub.s32 %v615, %v617
  %v619 = vrot.slane %v611, %v618
  %621 = vset.pattern.permute.xlu0 0
  %622 = vperm.xlu0 %621, %v434
  %v623 = vpop.permute.xlu0 %622
  %v626 = vunpack.c.l.s4 839922192
  %v627 = vunpack.c.0.s8 %v626
  %v628 = vlaneseq
  %v629 = vshrl.u32 %v628, 7
  %v630 = vsub.s32 %v627, %v629
  %v631 = vrot.slane %v623, %v630
  %633 = vset.pattern.permute.xlu0 0
  %634 = vperm.xlu0 %633, %v435
  %v635 = vpop.permute.xlu0 %634
  %v638 = vunpack.c.l.s4 839922192
  %v639 = vunpack.c.0.s8 %v638
  %v640 = vlaneseq
  %v641 = vshrl.u32 %v640, 7
  %v642 = vsub.s32 %v639, %v641
  %v643 = vrot.slane %v635, %v642
  %645 = vset.pattern.permute.xlu0 0
  %646 = vperm.xlu0 %645, %v436
  %v647 = vpop.permute.xlu0 %646
  %v650 = vunpack.c.l.s4 839922192
  %v651 = vunpack.c.0.s8 %v650
  %v652 = vlaneseq
  %v653 = vshrl.u32 %v652, 7
  %v654 = vsub.s32 %v651, %v653
  %v655 = vrot.slane %v647, %v654
  %657 = vset.pattern.permute.xlu0 0
  %658 = vperm.xlu0 %657, %v437
  %v659 = vpop.permute.xlu0 %658
  %v662 = vunpack.c.l.s4 839922192
  %v663 = vunpack.c.0.s8 %v662
  %v664 = vlaneseq
  %v665 = vshrl.u32 %v664, 7
  %v666 = vsub.s32 %v663, %v665
  %v667 = vrot.slane %v659, %v666
  %669 = vset.pattern.permute.xlu0 0
  %670 = vperm.xlu0 %669, %v438
  %v671 = vpop.permute.xlu0 %670
  %v674 = vunpack.c.l.s4 839922192
  %v675 = vunpack.c.0.s8 %v674
  %v676 = vlaneseq
  %v677 = vshrl.u32 %v676, 7
  %v678 = vsub.s32 %v675, %v677
  %v679 = vrot.slane %v671, %v678
  %681 = vset.pattern.permute.xlu0 0
  %682 = vperm.xlu0 %681, %v439
  %v683 = vpop.permute.xlu0 %682
  %v686 = vunpack.c.l.s4 839922192
  %v687 = vunpack.c.0.s8 %v686
  %v688 = vlaneseq
  %v689 = vshrl.u32 %v688, 7
  %v690 = vsub.s32 %v687, %v689
  %v691 = vrot.slane %v683, %v690
  %693 = vset.pattern.permute.xlu0 0
  %694 = vperm.xlu0 %693, %v440
  %v695 = vpop.permute.xlu0 %694
  %v698 = vunpack.c.l.s4 839922192
  %v699 = vunpack.c.0.s8 %v698
  %v700 = vlaneseq
  %v701 = vshrl.u32 %v700, 7
  %v702 = vsub.s32 %v699, %v701
  %v703 = vrot.slane %v695, %v702
  %705 = vset.pattern.permute.xlu0 0
  %706 = vperm.xlu0 %705, %v441
  %v707 = vpop.permute.xlu0 %706
  %v710 = vunpack.c.l.s4 839922192
  %v711 = vunpack.c.0.s8 %v710
  %v712 = vlaneseq
  %v713 = vshrl.u32 %v712, 7
  %v714 = vsub.s32 %v711, %v713
  %v715 = vrot.slane %v707, %v714
  %717 = vset.pattern.permute.xlu0 0
  %718 = vperm.xlu0 %717, %v442
  %v719 = vpop.permute.xlu0 %718
  %v722 = vunpack.c.l.s4 839922192
  %v723 = vunpack.c.0.s8 %v722
  %v724 = vlaneseq
  %v725 = vshrl.u32 %v724, 7
  %v726 = vsub.s32 %v723, %v725
  %v727 = vrot.slane %v719, %v726
  %729 = vset.pattern.permute.xlu0 0
  %730 = vperm.xlu0 %729, %v443
  %v731 = vpop.permute.xlu0 %730
  %v734 = vunpack.c.l.s4 839922192
  %v735 = vunpack.c.0.s8 %v734
  %v736 = vlaneseq
  %v737 = vshrl.u32 %v736, 7
  %v738 = vsub.s32 %v735, %v737
  %v739 = vrot.slane %v731, %v738
  %741 = vset.pattern.permute.xlu0 0
  %742 = vperm.xlu0 %741, %v444
  %v743 = vpop.permute.xlu0 %742
  %v746 = vunpack.c.l.s4 839922192
  %v747 = vunpack.c.0.s8 %v746
  %v748 = vlaneseq
  %v749 = vshrl.u32 %v748, 7
  %v750 = vsub.s32 %v747, %v749
  %v751 = vrot.slane %v743, %v750
  %753 = vset.pattern.permute.xlu0 0
  %754 = vperm.xlu0 %753, %v445
  %v755 = vpop.permute.xlu0 %754
  %v758 = vunpack.c.l.s4 839922192
  %v759 = vunpack.c.0.s8 %v758
  %v760 = vlaneseq
  %v761 = vshrl.u32 %v760, 7
  %v762 = vsub.s32 %v759, %v761
  %v763 = vrot.slane %v755, %v762
  %765 = vset.pattern.permute.xlu0 0
  %766 = vperm.xlu0 %765, %v446
  %v767 = vpop.permute.xlu0 %766
  %v770 = vunpack.c.l.s4 839922192
  %v771 = vunpack.c.0.s8 %v770
  %v772 = vlaneseq
  %v773 = vshrl.u32 %v772, 7
  %v774 = vsub.s32 %v771, %v773
  %v775 = vrot.slane %v767, %v774
  %777 = vset.pattern.permute.xlu0 0
  %778 = vperm.xlu0 %777, %v447
  %v779 = vpop.permute.xlu0 %778
  %v782 = vunpack.c.l.s4 839922192
  %v783 = vunpack.c.0.s8 %v782
  %v784 = vlaneseq
  %v785 = vshrl.u32 %v784, 7
  %v786 = vsub.s32 %v783, %v785
  %v787 = vrot.slane %v779, %v786
  %789 = vset.pattern.permute.xlu0 0
  %790 = vperm.xlu0 %789, %v448
  %v791 = vpop.permute.xlu0 %790
  %v794 = vunpack.c.l.s4 839922192
  %v795 = vunpack.c.0.s8 %v794
  %v796 = vlaneseq
  %v797 = vshrl.u32 %v796, 7
  %v798 = vsub.s32 %v795, %v797
  %v799 = vrot.slane %v791, %v798
  %801 = vset.pattern.permute.xlu0 0
  %802 = vperm.xlu0 %801, %v449
  %v803 = vpop.permute.xlu0 %802
  %v806 = vunpack.c.l.s4 839922192
  %v807 = vunpack.c.0.s8 %v806
  %v808 = vlaneseq
  %v809 = vshrl.u32 %v808, 7
  %v810 = vsub.s32 %v807, %v809
  %v811 = vrot.slane %v803, %v810
  %813 = vset.pattern.permute.xlu0 0
  %814 = vperm.xlu0 %813, %v450
  %v815 = vpop.permute.xlu0 %814
  %v818 = vunpack.c.l.s4 839922192
  %v819 = vunpack.c.0.s8 %v818
  %v820 = vlaneseq
  %v821 = vshrl.u32 %v820, 7
  %v822 = vsub.s32 %v819, %v821
  %v823 = vrot.slane %v815, %v822
  %825 = vset.pattern.permute.xlu0 0
  %826 = vperm.xlu0 %825, %v451
  %v827 = vpop.permute.xlu0 %826
  %v830 = vunpack.c.l.s4 839922192
  %v831 = vunpack.c.0.s8 %v830
  %v832 = vlaneseq
  %v833 = vshrl.u32 %v832, 7
  %v834 = vsub.s32 %v831, %v833
  %v835 = vrot.slane %v827, %v834
  %v868 = vunpack.c.l.b16 %v463
  %v869 = vunpack.c.l.b16 %v475
  %v870 = vunpack.c.l.b16 %v487
  %v871 = vunpack.c.l.b16 %v499
  %v872 = vunpack.c.l.b16 %v511
  %v873 = vunpack.c.l.b16 %v523
  %v874 = vunpack.c.l.b16 %v535
  %v875 = vunpack.c.l.b16 %v547
  %v876 = vunpack.c.l.b16 %v559
  %v877 = vunpack.c.l.b16 %v571
  %v878 = vunpack.c.l.b16 %v583
  %v879 = vunpack.c.l.b16 %v595
  %v880 = vunpack.c.l.b16 %v607
  %v881 = vunpack.c.l.b16 %v619
  %v882 = vunpack.c.l.b16 %v631
  %v883 = vunpack.c.l.b16 %v643
  %v884 = vunpack.c.l.b16 %v655
  %v885 = vunpack.c.l.b16 %v667
  %v886 = vunpack.c.l.b16 %v679
  %v887 = vunpack.c.l.b16 %v691
  %v888 = vunpack.c.l.b16 %v703
  %v889 = vunpack.c.l.b16 %v715
  %v890 = vunpack.c.l.b16 %v727
  %v891 = vunpack.c.l.b16 %v739
  %v892 = vunpack.c.l.b16 %v751
  %v893 = vunpack.c.l.b16 %v763
  %v894 = vunpack.c.l.b16 %v775
  %v895 = vunpack.c.l.b16 %v787
  %v896 = vunpack.c.l.b16 %v799
  %v897 = vunpack.c.l.b16 %v811
  %v898 = vunpack.c.l.b16 %v823
  %v899 = vunpack.c.l.b16 %v835
  %v900 = vpack.c.b16 %v869, %v868
  %v901 = vpack.c.b16 %v871, %v870
  %v902 = vpack.c.b16 %v873, %v872
  %v903 = vpack.c.b16 %v875, %v874
  %v904 = vpack.c.b16 %v877, %v876
  %v905 = vpack.c.b16 %v879, %v878
  %v906 = vpack.c.b16 %v881, %v880
  %v907 = vpack.c.b16 %v883, %v882
  %v908 = vpack.c.b16 %v885, %v884
  %v909 = vpack.c.b16 %v887, %v886
  %v910 = vpack.c.b16 %v889, %v888
  %v911 = vpack.c.b16 %v891, %v890
  %v912 = vpack.c.b16 %v893, %v892
  %v913 = vpack.c.b16 %v895, %v894
  %v914 = vpack.c.b16 %v897, %v896
  %v915 = vpack.c.b16 %v899, %v898
  %v932 = vadd.bf16 %v404, %v900
  %v933 = vadd.bf16 %v405, %v901
  %v934 = vadd.bf16 %v406, %v902
  %v935 = vadd.bf16 %v407, %v903
  %v936 = vadd.bf16 %v408, %v904
  %v937 = vadd.bf16 %v409, %v905
  %v938 = vadd.bf16 %v410, %v906
  %v939 = vadd.bf16 %v411, %v907
  %v940 = vadd.bf16 %v412, %v908
  %v941 = vadd.bf16 %v413, %v909
  %v942 = vadd.bf16 %v414, %v910
  %v943 = vadd.bf16 %v415, %v911
  %v944 = vadd.bf16 %v416, %v912
  %v945 = vadd.bf16 %v417, %v913
  %v946 = vadd.bf16 %v418, %v914
  %v947 = vadd.bf16 %v419, %v915
  %v948 = vmax.bf16 %v932, 0
  %v949 = vmax.bf16 %v933, 0
  %v950 = vmax.bf16 %v934, 0
  %v951 = vmax.bf16 %v935, 0
  %v952 = vmax.bf16 %v936, 0
  %v953 = vmax.bf16 %v937, 0
  %v954 = vmax.bf16 %v938, 0
  %v955 = vmax.bf16 %v939, 0
  %v956 = vmax.bf16 %v940, 0
  %v957 = vmax.bf16 %v941, 0
  %v958 = vmax.bf16 %v942, 0
  %v959 = vmax.bf16 %v943, 0
  %v960 = vmax.bf16 %v944, 0
  %v961 = vmax.bf16 %v945, 0
  %v962 = vmax.bf16 %v946, 0
  %v963 = vmax.bf16 %v947, 0
  %v964 = vld [vmem:[%s3] sm:$0xff]
  %v965 = vld [vmem:[%s3 + $0x8] sm:$0xff]
  %v966 = vld [vmem:[%s3 + $0x10] sm:$0xff]
  %v967 = vld [vmem:[%s3 + $0x18] sm:$0xff]
  %v968 = vld [vmem:[%s3 + $0x20] sm:$0xff]
  %v969 = vld [vmem:[%s3 + $0x28] sm:$0xff]
  %v970 = vld [vmem:[%s3 + $0x30] sm:$0xff]
  %v971 = vld [vmem:[%s3 + $0x38] sm:$0xff]
  %v972 = vld [vmem:[%s3 + $0x40] sm:$0xff]
  %v973 = vld [vmem:[%s3 + $0x48] sm:$0xff]
  %v974 = vld [vmem:[%s3 + $0x50] sm:$0xff]
  %v975 = vld [vmem:[%s3 + $0x58] sm:$0xff]
  %v976 = vld [vmem:[%s3 + $0x60] sm:$0xff]
  %v977 = vld [vmem:[%s3 + $0x68] sm:$0xff]
  %v978 = vld [vmem:[%s3 + $0x70] sm:$0xff]
  %v979 = vld [vmem:[%s3 + $0x78] sm:$0xff]
  %v980 = vld [vmem:[%s3 + $0x80] sm:$0xff]
  %v981 = vld [vmem:[%s3 + $0x88] sm:$0xff]
  %v982 = vld [vmem:[%s3 + $0x90] sm:$0xff]
  %v983 = vld [vmem:[%s3 + $0x98] sm:$0xff]
  %v984 = vld [vmem:[%s3 + $0xa0] sm:$0xff]
  %v985 = vld [vmem:[%s3 + $0xa8] sm:$0xff]
  %v986 = vld [vmem:[%s3 + $0xb0] sm:$0xff]
  %v987 = vld [vmem:[%s3 + $0xb8] sm:$0xff]
  %v988 = vld [vmem:[%s3 + $0xc0] sm:$0xff]
  %v989 = vld [vmem:[%s3 + $0xc8] sm:$0xff]
  %v990 = vld [vmem:[%s3 + $0xd0] sm:$0xff]
  %v991 = vld [vmem:[%s3 + $0xd8] sm:$0xff]
  %v992 = vld [vmem:[%s3 + $0xe0] sm:$0xff]
  %v993 = vld [vmem:[%s3 + $0xe8] sm:$0xff]
  %v994 = vld [vmem:[%s3 + $0xf0] sm:$0xff]
  %v995 = vld [vmem:[%s3 + $0xf8] sm:$0xff]
  %v1028 = vunpack.c.l.b16 %v964
  %v1029 = vunpack.c.h.b16 %v964
  %v1030 = vunpack.c.l.b16 %v965
  %v1031 = vunpack.c.h.b16 %v965
  %v1032 = vunpack.c.l.b16 %v966
  %v1033 = vunpack.c.h.b16 %v966
  %v1034 = vunpack.c.l.b16 %v967
  %v1035 = vunpack.c.h.b16 %v967
  %v1036 = vunpack.c.l.b16 %v968
  %v1037 = vunpack.c.h.b16 %v968
  %v1038 = vunpack.c.l.b16 %v969
  %v1039 = vunpack.c.h.b16 %v969
  %v1040 = vunpack.c.l.b16 %v970
  %v1041 = vunpack.c.h.b16 %v970
  %v1042 = vunpack.c.l.b16 %v971
  %v1043 = vunpack.c.h.b16 %v971
  %v1044 = vunpack.c.l.b16 %v972
  %v1045 = vunpack.c.h.b16 %v972
  %v1046 = vunpack.c.l.b16 %v973
  %v1047 = vunpack.c.h.b16 %v973
  %v1048 = vunpack.c.l.b16 %v974
  %v1049 = vunpack.c.h.b16 %v974
  %v1050 = vunpack.c.l.b16 %v975
  %v1051 = vunpack.c.h.b16 %v975
  %v1052 = vunpack.c.l.b16 %v976
  %v1053 = vunpack.c.h.b16 %v976
  %v1054 = vunpack.c.l.b16 %v977
  %v1055 = vunpack.c.h.b16 %v977
  %v1056 = vunpack.c.l.b16 %v978
  %v1057 = vunpack.c.h.b16 %v978
  %v1058 = vunpack.c.l.b16 %v979
  %v1059 = vunpack.c.h.b16 %v979
  %v1060 = vunpack.c.l.b16 %v980
  %v1061 = vunpack.c.h.b16 %v980
  %v1062 = vunpack.c.l.b16 %v981
  %v1063 = vunpack.c.h.b16 %v981
  %v1064 = vunpack.c.l.b16 %v982
  %v1065 = vunpack.c.h.b16 %v982
  %v1066 = vunpack.c.l.b16 %v983
  %v1067 = vunpack.c.h.b16 %v983
  %v1068 = vunpack.c.l.b16 %v984
  %v1069 = vunpack.c.h.b16 %v984
  %v1070 = vunpack.c.l.b16 %v985
  %v1071 = vunpack.c.h.b16 %v985
  %v1072 = vunpack.c.l.b16 %v986
  %v1073 = vunpack.c.h.b16 %v986
  %v1074 = vunpack.c.l.b16 %v987
  %v1075 = vunpack.c.h.b16 %v987
  %v1076 = vunpack.c.l.b16 %v988
  %v1077 = vunpack.c.h.b16 %v988
  %v1078 = vunpack.c.l.b16 %v989
  %v1079 = vunpack.c.h.b16 %v989
  %v1080 = vunpack.c.l.b16 %v990
  %v1081 = vunpack.c.h.b16 %v990
  %v1082 = vunpack.c.l.b16 %v991
  %v1083 = vunpack.c.h.b16 %v991
  %v1084 = vunpack.c.l.b16 %v992
  %v1085 = vunpack.c.h.b16 %v992
  %v1086 = vunpack.c.l.b16 %v993
  %v1087 = vunpack.c.h.b16 %v993
  %v1088 = vunpack.c.l.b16 %v994
  %v1089 = vunpack.c.h.b16 %v994
  %v1090 = vunpack.c.l.b16 %v995
  %v1091 = vunpack.c.h.b16 %v995
  %v1092 = vpack.c.b16 %v1030, %v1028
  %v1093 = vpack.c.b16 %v1031, %v1029
  %v1094 = vpack.c.b16 %v1034, %v1032
  %v1095 = vpack.c.b16 %v1035, %v1033
  %v1096 = vpack.c.b16 %v1038, %v1036
  %v1097 = vpack.c.b16 %v1039, %v1037
  %v1098 = vpack.c.b16 %v1042, %v1040
  %v1099 = vpack.c.b16 %v1043, %v1041
  %v1100 = vpack.c.b16 %v1046, %v1044
  %v1101 = vpack.c.b16 %v1047, %v1045
  %v1102 = vpack.c.b16 %v1050, %v1048
  %v1103 = vpack.c.b16 %v1051, %v1049
  %v1104 = vpack.c.b16 %v1054, %v1052
  %v1105 = vpack.c.b16 %v1055, %v1053
  %v1106 = vpack.c.b16 %v1058, %v1056
  %v1107 = vpack.c.b16 %v1059, %v1057
  %v1108 = vpack.c.b16 %v1062, %v1060
  %v1109 = vpack.c.b16 %v1063, %v1061
  %v1110 = vpack.c.b16 %v1066, %v1064
  %v1111 = vpack.c.b16 %v1067, %v1065
  %v1112 = vpack.c.b16 %v1070, %v1068
  %v1113 = vpack.c.b16 %v1071, %v1069
  %v1114 = vpack.c.b16 %v1074, %v1072
  %v1115 = vpack.c.b16 %v1075, %v1073
  %v1116 = vpack.c.b16 %v1078, %v1076
  %v1117 = vpack.c.b16 %v1079, %v1077
  %v1118 = vpack.c.b16 %v1082, %v1080
  %v1119 = vpack.c.b16 %v1083, %v1081
  %v1120 = vpack.c.b16 %v1086, %v1084
  %v1121 = vpack.c.b16 %v1087, %v1085
  %v1122 = vpack.c.b16 %v1090, %v1088
  %v1123 = vpack.c.b16 %v1091, %v1089
  %1156 = vmatprep.subr.bf16.mxu0 0
  %1157 = vmatpush1.bf16.msra.mxu0 %v948
  %1158 = vmatprep.subr.bf16.mxu0 0
  %1159 = vmatpush1.bf16.msra.mxu0 %v949
  %1160 = vmatprep.subr.bf16.mxu0 0
  %1161 = vmatpush1.bf16.msra.mxu0 %v950
  %1162 = vmatprep.subr.bf16.mxu0 0
  %1163 = vmatpush1.bf16.msra.mxu0 %v951
  %1164 = vmatprep.subr.bf16.mxu0 0
  %1165 = vmatpush1.bf16.msra.mxu0 %v952
  %1166 = vmatprep.subr.bf16.mxu0 0
  %1167 = vmatpush1.bf16.msra.mxu0 %v953
  %1168 = vmatprep.subr.bf16.mxu0 0
  %1169 = vmatpush1.bf16.msra.mxu0 %v954
  %1170 = vmatprep.subr.bf16.mxu0 0
  %1171 = vmatpush1.bf16.msra.mxu0 %v955
  %1172 = vmatprep.subr.bf16.mxu0 0
  %1173 = vmatpush1.bf16.msra.mxu0 %v956
  %1174 = vmatprep.subr.bf16.mxu0 0
  %1175 = vmatpush1.bf16.msra.mxu0 %v957
  %1176 = vmatprep.subr.bf16.mxu0 0
  %1177 = vmatpush1.bf16.msra.mxu0 %v958
  %1178 = vmatprep.subr.bf16.mxu0 0
  %1179 = vmatpush1.bf16.msra.mxu0 %v959
  %1180 = vmatprep.subr.bf16.mxu0 0
  %1181 = vmatpush1.bf16.msra.mxu0 %v960
  %1182 = vmatprep.subr.bf16.mxu0 0
  %1183 = vmatpush1.bf16.msra.mxu0 %v961
  %1184 = vmatprep.subr.bf16.mxu0 0
  %1185 = vmatpush1.bf16.msra.mxu0 %v962
  %1186 = vmatprep.subr.bf16.mxu0 0
  %1187 = vmatpush1.bf16.msra.mxu0 %v963
  %1188 = vmatprep.mubr.bf16.mxu0 %v1093
  %1189 = vmatmul.mubr.bf16.gmra.mrb[0].mxu0 %v1092
  %v1190 = vpop.f32.mrb[0].mxu0
  %v1191 = vadd.f32 0.0, %v1190
  %v1192 = vpop.f32.mrb[0].mxu0
  %v1193 = vpop.f32.mrb[0].mxu0
  %v1194 = vadd.f32 0.0, %v1193
  %v1195 = vpop.f32.mrb[0].mxu0
  %1196 = vmatprep.mubr.bf16.mxu0 %v1095
  %1197 = vmatmul.mubr.bf16.gmra.mrb[0].mxu0 %v1094
  %v1198 = vpop.f32.mrb[0].mxu0
  %v1199 = vadd.f32 0.0, %v1198
  %v1200 = vpop.f32.mrb[0].mxu0
  %v1201 = vpop.f32.mrb[0].mxu0
  %v1202 = vadd.f32 0.0, %v1201
  %v1203 = vpop.f32.mrb[0].mxu0
  %1204 = vmatprep.mubr.bf16.mxu0 %v1097
  %1205 = vmatmul.mubr.bf16.gmra.mrb[0].mxu0 %v1096
  %v1206 = vpop.f32.mrb[0].mxu0
  %v1207 = vadd.f32 0.0, %v1206
  %v1208 = vpop.f32.mrb[0].mxu0
  %v1209 = vpop.f32.mrb[0].mxu0
  %v1210 = vadd.f32 0.0, %v1209
  %v1211 = vpop.f32.mrb[0].mxu0
  %1212 = vmatprep.mubr.bf16.mxu0 %v1099
  %1213 = vmatmul.mubr.bf16.gmra.mrb[0].mxu0 %v1098
  %v1214 = vpop.f32.mrb[0].mxu0
  %v1215 = vadd.f32 0.0, %v1214
  %v1216 = vpop.f32.mrb[0].mxu0
  %v1217 = vpop.f32.mrb[0].mxu0
  %v1218 = vadd.f32 0.0, %v1217
  %v1219 = vpop.f32.mrb[0].mxu0
  %1220 = vmatprep.mubr.bf16.mxu0 %v1101
  %1221 = vmatmul.mubr.bf16.gmra.mrb[0].mxu0 %v1100
  %v1222 = vpop.f32.mrb[0].mxu0
  %v1223 = vadd.f32 0.0, %v1222
  %v1224 = vpop.f32.mrb[0].mxu0
  %v1225 = vpop.f32.mrb[0].mxu0
  %v1226 = vadd.f32 0.0, %v1225
  %v1227 = vpop.f32.mrb[0].mxu0
  %1228 = vmatprep.mubr.bf16.mxu0 %v1103
  %1229 = vmatmul.mubr.bf16.gmra.mrb[0].mxu0 %v1102
  %v1230 = vpop.f32.mrb[0].mxu0
  %v1231 = vadd.f32 0.0, %v1230
  %v1232 = vpop.f32.mrb[0].mxu0
  %v1233 = vpop.f32.mrb[0].mxu0
  %v1234 = vadd.f32 0.0, %v1233
  %v1235 = vpop.f32.mrb[0].mxu0
  %1236 = vmatprep.mubr.bf16.mxu0 %v1105
  %1237 = vmatmul.mubr.bf16.gmra.mrb[0].mxu0 %v1104
  %v1238 = vpop.f32.mrb[0].mxu0
  %v1239 = vadd.f32 0.0, %v1238
  %v1240 = vpop.f32.mrb[0].mxu0
  %v1241 = vpop.f32.mrb[0].mxu0
  %v1242 = vadd.f32 0.0, %v1241
  %v1243 = vpop.f32.mrb[0].mxu0
  %1244 = vmatprep.mubr.bf16.mxu0 %v1107
  %1245 = vmatmul.mubr.bf16.gmra.mrb[0].mxu0 %v1106
  %v1246 = vpop.f32.mrb[0].mxu0
  %v1247 = vadd.f32 0.0, %v1246
  %v1248 = vpop.f32.mrb[0].mxu0
  %v1249 = vpop.f32.mrb[0].mxu0
  %v1250 = vadd.f32 0.0, %v1249
  %v1251 = vpop.f32.mrb[0].mxu0
  %1252 = vmatprep.mubr.bf16.mxu0 %v1109
  %1253 = vmatmul.mubr.bf16.gmra.mrb[0].mxu0 %v1108
  %v1254 = vpop.f32.mrb[0].mxu0
  %v1255 = vadd.f32 0.0, %v1254
  %v1256 = vpop.f32.mrb[0].mxu0
  %v1257 = vpop.f32.mrb[0].mxu0
  %v1258 = vadd.f32 0.0, %v1257
  %v1259 = vpop.f32.mrb[0].mxu0
  %1260 = vmatprep.mubr.bf16.mxu0 %v1111
  %1261 = vmatmul.mubr.bf16.gmra.mrb[0].mxu0 %v1110
  %v1262 = vpop.f32.mrb[0].mxu0
  %v1263 = vadd.f32 0.0, %v1262
  %v1264 = vpop.f32.mrb[0].mxu0
  %v1265 = vpop.f32.mrb[0].mxu0
  %v1266 = vadd.f32 0.0, %v1265
  %v1267 = vpop.f32.mrb[0].mxu0
  %1268 = vmatprep.mubr.bf16.mxu0 %v1113
  %1269 = vmatmul.mubr.bf16.gmra.mrb[0].mxu0 %v1112
  %v1270 = vpop.f32.mrb[0].mxu0
  %v1271 = vadd.f32 0.0, %v1270
  %v1272 = vpop.f32.mrb[0].mxu0
  %v1273 = vpop.f32.mrb[0].mxu0
  %v1274 = vadd.f32 0.0, %v1273
  %v1275 = vpop.f32.mrb[0].mxu0
  %1276 = vmatprep.mubr.bf16.mxu0 %v1115
  %1277 = vmatmul.mubr.bf16.gmra.mrb[0].mxu0 %v1114
  %v1278 = vpop.f32.mrb[0].mxu0
  %v1279 = vadd.f32 0.0, %v1278
  %v1280 = vpop.f32.mrb[0].mxu0
  %v1281 = vpop.f32.mrb[0].mxu0
  %v1282 = vadd.f32 0.0, %v1281
  %v1283 = vpop.f32.mrb[0].mxu0
  %1284 = vmatprep.mubr.bf16.mxu0 %v1117
  %1285 = vmatmul.mubr.bf16.gmra.mrb[0].mxu0 %v1116
  %v1286 = vpop.f32.mrb[0].mxu0
  %v1287 = vadd.f32 0.0, %v1286
  %v1288 = vpop.f32.mrb[0].mxu0
  %v1289 = vpop.f32.mrb[0].mxu0
  %v1290 = vadd.f32 0.0, %v1289
  %v1291 = vpop.f32.mrb[0].mxu0
  %1292 = vmatprep.mubr.bf16.mxu0 %v1119
  %1293 = vmatmul.mubr.bf16.gmra.mrb[0].mxu0 %v1118
  %v1294 = vpop.f32.mrb[0].mxu0
  %v1295 = vadd.f32 0.0, %v1294
  %v1296 = vpop.f32.mrb[0].mxu0
  %v1297 = vpop.f32.mrb[0].mxu0
  %v1298 = vadd.f32 0.0, %v1297
  %v1299 = vpop.f32.mrb[0].mxu0
  %1300 = vmatprep.mubr.bf16.mxu0 %v1121
  %1301 = vmatmul.mubr.bf16.gmra.mrb[0].mxu0 %v1120
  %v1302 = vpop.f32.mrb[0].mxu0
  %v1303 = vadd.f32 0.0, %v1302
  %v1304 = vpop.f32.mrb[0].mxu0
  %v1305 = vpop.f32.mrb[0].mxu0
  %v1306 = vadd.f32 0.0, %v1305
  %v1307 = vpop.f32.mrb[0].mxu0
  %1308 = vmatprep.mubr.bf16.mxu0 %v1123
  %1309 = vmatmul.mubr.bf16.gmra.mrb[0].mxu0 %v1122
  %v1310 = vpop.f32.mrb[0].mxu0
  %v1311 = vadd.f32 0.0, %v1310
  %v1312 = vpop.f32.mrb[0].mxu0
  %v1313 = vpop.f32.mrb[0].mxu0
  %v1314 = vadd.f32 0.0, %v1313
  %v1315 = vpop.f32.mrb[0].mxu0
  %1316 = vdwg.mxu0
  %v1317 = vpack.c.bf16 %v1194, %v1191
  %v1318 = vpack.c.bf16 %v1202, %v1199
  %v1319 = vpack.c.bf16 %v1210, %v1207
  %v1320 = vpack.c.bf16 %v1218, %v1215
  %v1321 = vpack.c.bf16 %v1226, %v1223
  %v1322 = vpack.c.bf16 %v1234, %v1231
  %v1323 = vpack.c.bf16 %v1242, %v1239
  %v1324 = vpack.c.bf16 %v1250, %v1247
  %v1325 = vpack.c.bf16 %v1258, %v1255
  %v1326 = vpack.c.bf16 %v1266, %v1263
  %v1327 = vpack.c.bf16 %v1274, %v1271
  %v1328 = vpack.c.bf16 %v1282, %v1279
  %v1329 = vpack.c.bf16 %v1290, %v1287
  %v1330 = vpack.c.bf16 %v1298, %v1295
  %v1331 = vpack.c.bf16 %v1306, %v1303
  %v1332 = vpack.c.bf16 %v1314, %v1311
  %v1333 = vld [vmem:[%s4] sm:$0xf]
  %v1334 = vld [vmem:[%s4 + $0x4] sm:$0xf]
  %v1335 = vld [vmem:[%s4 + $0x8] sm:$0xf]
  %v1336 = vld [vmem:[%s4 + $0xc] sm:$0xf]
  %v1337 = vld [vmem:[%s4 + $0x10] sm:$0xf]
  %v1338 = vld [vmem:[%s4 + $0x14] sm:$0xf]
  %v1339 = vld [vmem:[%s4 + $0x18] sm:$0xf]
  %v1340 = vld [vmem:[%s4 + $0x1c] sm:$0xf]
  %v1341 = vld [vmem:[%s4 + $0x20] sm:$0xf]
  %v1342 = vld [vmem:[%s4 + $0x24] sm:$0xf]
  %v1343 = vld [vmem:[%s4 + $0x28] sm:$0xf]
  %v1344 = vld [vmem:[%s4 + $0x2c] sm:$0xf]
  %v1345 = vld [vmem:[%s4 + $0x30] sm:$0xf]
  %v1346 = vld [vmem:[%s4 + $0x34] sm:$0xf]
  %v1347 = vld [vmem:[%s4 + $0x38] sm:$0xf]
  %v1348 = vld [vmem:[%s4 + $0x3c] sm:$0xf]
  %v1349 = vld [vmem:[%s4 + $0x40] sm:$0xf]
  %v1350 = vld [vmem:[%s4 + $0x44] sm:$0xf]
  %v1351 = vld [vmem:[%s4 + $0x48] sm:$0xf]
  %v1352 = vld [vmem:[%s4 + $0x4c] sm:$0xf]
  %v1353 = vld [vmem:[%s4 + $0x50] sm:$0xf]
  %v1354 = vld [vmem:[%s4 + $0x54] sm:$0xf]
  %v1355 = vld [vmem:[%s4 + $0x58] sm:$0xf]
  %v1356 = vld [vmem:[%s4 + $0x5c] sm:$0xf]
  %v1357 = vld [vmem:[%s4 + $0x60] sm:$0xf]
  %v1358 = vld [vmem:[%s4 + $0x64] sm:$0xf]
  %v1359 = vld [vmem:[%s4 + $0x68] sm:$0xf]
  %v1360 = vld [vmem:[%s4 + $0x6c] sm:$0xf]
  %v1361 = vld [vmem:[%s4 + $0x70] sm:$0xf]
  %v1362 = vld [vmem:[%s4 + $0x74] sm:$0xf]
  %v1363 = vld [vmem:[%s4 + $0x78] sm:$0xf]
  %v1364 = vld [vmem:[%s4 + $0x7c] sm:$0xf]
  %1366 = vset.pattern.permute.xlu0 0
  %1367 = vperm.xlu0 %1366, %v1333
  %v1368 = vpop.permute.xlu0 %1367
  %v1371 = vunpack.c.l.s4 839922192
  %v1372 = vunpack.c.0.s8 %v1371
  %v1373 = vlaneseq
  %v1374 = vshrl.u32 %v1373, 7
  %v1375 = vsub.s32 %v1372, %v1374
  %v1376 = vrot.slane %v1368, %v1375
  %1378 = vset.pattern.permute.xlu0 0
  %1379 = vperm.xlu0 %1378, %v1334
  %v1380 = vpop.permute.xlu0 %1379
  %v1383 = vunpack.c.l.s4 839922192
  %v1384 = vunpack.c.0.s8 %v1383
  %v1385 = vlaneseq
  %v1386 = vshrl.u32 %v1385, 7
  %v1387 = vsub.s32 %v1384, %v1386
  %v1388 = vrot.slane %v1380, %v1387
  %1390 = vset.pattern.permute.xlu0 0
  %1391 = vperm.xlu0 %1390, %v1335
  %v1392 = vpop.permute.xlu0 %1391
  %v1395 = vunpack.c.l.s4 839922192
  %v1396 = vunpack.c.0.s8 %v1395
  %v1397 = vlaneseq
  %v1398 = vshrl.u32 %v1397, 7
  %v1399 = vsub.s32 %v1396, %v1398
  %v1400 = vrot.slane %v1392, %v1399
  %1402 = vset.pattern.permute.xlu0 0
  %1403 = vperm.xlu0 %1402, %v1336
  %v1404 = vpop.permute.xlu0 %1403
  %v1407 = vunpack.c.l.s4 839922192
  %v1408 = vunpack.c.0.s8 %v1407
  %v1409 = vlaneseq
  %v1410 = vshrl.u32 %v1409, 7
  %v1411 = vsub.s32 %v1408, %v1410
  %v1412 = vrot.slane %v1404, %v1411
  %1414 = vset.pattern.permute.xlu0 0
  %1415 = vperm.xlu0 %1414, %v1337
  %v1416 = vpop.permute.xlu0 %1415
  %v1419 = vunpack.c.l.s4 839922192
  %v1420 = vunpack.c.0.s8 %v1419
  %v1421 = vlaneseq
  %v1422 = vshrl.u32 %v1421, 7
  %v1423 = vsub.s32 %v1420, %v1422
  %v1424 = vrot.slane %v1416, %v1423
  %1426 = vset.pattern.permute.xlu0 0
  %1427 = vperm.xlu0 %1426, %v1338
  %v1428 = vpop.permute.xlu0 %1427
  %v1431 = vunpack.c.l.s4 839922192
  %v1432 = vunpack.c.0.s8 %v1431
  %v1433 = vlaneseq
  %v1434 = vshrl.u32 %v1433, 7
  %v1435 = vsub.s32 %v1432, %v1434
  %v1436 = vrot.slane %v1428, %v1435
  %1438 = vset.pattern.permute.xlu0 0
  %1439 = vperm.xlu0 %1438, %v1339
  %v1440 = vpop.permute.xlu0 %1439
  %v1443 = vunpack.c.l.s4 839922192
  %v1444 = vunpack.c.0.s8 %v1443
  %v1445 = vlaneseq
  %v1446 = vshrl.u32 %v1445, 7
  %v1447 = vsub.s32 %v1444, %v1446
  %v1448 = vrot.slane %v1440, %v1447
  %1450 = vset.pattern.permute.xlu0 0
  %1451 = vperm.xlu0 %1450, %v1340
  %v1452 = vpop.permute.xlu0 %1451
  %v1455 = vunpack.c.l.s4 839922192
  %v1456 = vunpack.c.0.s8 %v1455
  %v1457 = vlaneseq
  %v1458 = vshrl.u32 %v1457, 7
  %v1459 = vsub.s32 %v1456, %v1458
  %v1460 = vrot.slane %v1452, %v1459
  %1462 = vset.pattern.permute.xlu0 0
  %1463 = vperm.xlu0 %1462, %v1341
  %v1464 = vpop.permute.xlu0 %1463
  %v1467 = vunpack.c.l.s4 839922192
  %v1468 = vunpack.c.0.s8 %v1467
  %v1469 = vlaneseq
  %v1470 = vshrl.u32 %v1469, 7
  %v1471 = vsub.s32 %v1468, %v1470
  %v1472 = vrot.slane %v1464, %v1471
  %1474 = vset.pattern.permute.xlu0 0
  %1475 = vperm.xlu0 %1474, %v1342
  %v1476 = vpop.permute.xlu0 %1475
  %v1479 = vunpack.c.l.s4 839922192
  %v1480 = vunpack.c.0.s8 %v1479
  %v1481 = vlaneseq
  %v1482 = vshrl.u32 %v1481, 7
  %v1483 = vsub.s32 %v1480, %v1482
  %v1484 = vrot.slane %v1476, %v1483
  %1486 = vset.pattern.permute.xlu0 0
  %1487 = vperm.xlu0 %1486, %v1343
  %v1488 = vpop.permute.xlu0 %1487
  %v1491 = vunpack.c.l.s4 839922192
  %v1492 = vunpack.c.0.s8 %v1491
  %v1493 = vlaneseq
  %v1494 = vshrl.u32 %v1493, 7
  %v1495 = vsub.s32 %v1492, %v1494
  %v1496 = vrot.slane %v1488, %v1495
  %1498 = vset.pattern.permute.xlu0 0
  %1499 = vperm.xlu0 %1498, %v1344
  %v1500 = vpop.permute.xlu0 %1499
  %v1503 = vunpack.c.l.s4 839922192
  %v1504 = vunpack.c.0.s8 %v1503
  %v1505 = vlaneseq
  %v1506 = vshrl.u32 %v1505, 7
  %v1507 = vsub.s32 %v1504, %v1506
  %v1508 = vrot.slane %v1500, %v1507
  %1510 = vset.pattern.permute.xlu0 0
  %1511 = vperm.xlu0 %1510, %v1345
  %v1512 = vpop.permute.xlu0 %1511
  %v1515 = vunpack.c.l.s4 839922192
  %v1516 = vunpack.c.0.s8 %v1515
  %v1517 = vlaneseq
  %v1518 = vshrl.u32 %v1517, 7
  %v1519 = vsub.s32 %v1516, %v1518
  %v1520 = vrot.slane %v1512, %v1519
  %1522 = vset.pattern.permute.xlu0 0
  %1523 = vperm.xlu0 %1522, %v1346
  %v1524 = vpop.permute.xlu0 %1523
  %v1527 = vunpack.c.l.s4 839922192
  %v1528 = vunpack.c.0.s8 %v1527
  %v1529 = vlaneseq
  %v1530 = vshrl.u32 %v1529, 7
  %v1531 = vsub.s32 %v1528, %v1530
  %v1532 = vrot.slane %v1524, %v1531
  %1534 = vset.pattern.permute.xlu0 0
  %1535 = vperm.xlu0 %1534, %v1347
  %v1536 = vpop.permute.xlu0 %1535
  %v1539 = vunpack.c.l.s4 839922192
  %v1540 = vunpack.c.0.s8 %v1539
  %v1541 = vlaneseq
  %v1542 = vshrl.u32 %v1541, 7
  %v1543 = vsub.s32 %v1540, %v1542
  %v1544 = vrot.slane %v1536, %v1543
  %1546 = vset.pattern.permute.xlu0 0
  %1547 = vperm.xlu0 %1546, %v1348
  %v1548 = vpop.permute.xlu0 %1547
  %v1551 = vunpack.c.l.s4 839922192
  %v1552 = vunpack.c.0.s8 %v1551
  %v1553 = vlaneseq
  %v1554 = vshrl.u32 %v1553, 7
  %v1555 = vsub.s32 %v1552, %v1554
  %v1556 = vrot.slane %v1548, %v1555
  %1558 = vset.pattern.permute.xlu0 0
  %1559 = vperm.xlu0 %1558, %v1349
  %v1560 = vpop.permute.xlu0 %1559
  %v1563 = vunpack.c.l.s4 839922192
  %v1564 = vunpack.c.0.s8 %v1563
  %v1565 = vlaneseq
  %v1566 = vshrl.u32 %v1565, 7
  %v1567 = vsub.s32 %v1564, %v1566
  %v1568 = vrot.slane %v1560, %v1567
  %1570 = vset.pattern.permute.xlu0 0
  %1571 = vperm.xlu0 %1570, %v1350
  %v1572 = vpop.permute.xlu0 %1571
  %v1575 = vunpack.c.l.s4 839922192
  %v1576 = vunpack.c.0.s8 %v1575
  %v1577 = vlaneseq
  %v1578 = vshrl.u32 %v1577, 7
  %v1579 = vsub.s32 %v1576, %v1578
  %v1580 = vrot.slane %v1572, %v1579
  %1582 = vset.pattern.permute.xlu0 0
  %1583 = vperm.xlu0 %1582, %v1351
  %v1584 = vpop.permute.xlu0 %1583
  %v1587 = vunpack.c.l.s4 839922192
  %v1588 = vunpack.c.0.s8 %v1587
  %v1589 = vlaneseq
  %v1590 = vshrl.u32 %v1589, 7
  %v1591 = vsub.s32 %v1588, %v1590
  %v1592 = vrot.slane %v1584, %v1591
  %1594 = vset.pattern.permute.xlu0 0
  %1595 = vperm.xlu0 %1594, %v1352
  %v1596 = vpop.permute.xlu0 %1595
  %v1599 = vunpack.c.l.s4 839922192
  %v1600 = vunpack.c.0.s8 %v1599
  %v1601 = vlaneseq
  %v1602 = vshrl.u32 %v1601, 7
  %v1603 = vsub.s32 %v1600, %v1602
  %v1604 = vrot.slane %v1596, %v1603
  %1606 = vset.pattern.permute.xlu0 0
  %1607 = vperm.xlu0 %1606, %v1353
  %v1608 = vpop.permute.xlu0 %1607
  %v1611 = vunpack.c.l.s4 839922192
  %v1612 = vunpack.c.0.s8 %v1611
  %v1613 = vlaneseq
  %v1614 = vshrl.u32 %v1613, 7
  %v1615 = vsub.s32 %v1612, %v1614
  %v1616 = vrot.slane %v1608, %v1615
  %1618 = vset.pattern.permute.xlu0 0
  %1619 = vperm.xlu0 %1618, %v1354
  %v1620 = vpop.permute.xlu0 %1619
  %v1623 = vunpack.c.l.s4 839922192
  %v1624 = vunpack.c.0.s8 %v1623
  %v1625 = vlaneseq
  %v1626 = vshrl.u32 %v1625, 7
  %v1627 = vsub.s32 %v1624, %v1626
  %v1628 = vrot.slane %v1620, %v1627
  %1630 = vset.pattern.permute.xlu0 0
  %1631 = vperm.xlu0 %1630, %v1355
  %v1632 = vpop.permute.xlu0 %1631
  %v1635 = vunpack.c.l.s4 839922192
  %v1636 = vunpack.c.0.s8 %v1635
  %v1637 = vlaneseq
  %v1638 = vshrl.u32 %v1637, 7
  %v1639 = vsub.s32 %v1636, %v1638
  %v1640 = vrot.slane %v1632, %v1639
  %1642 = vset.pattern.permute.xlu0 0
  %1643 = vperm.xlu0 %1642, %v1356
  %v1644 = vpop.permute.xlu0 %1643
  %v1647 = vunpack.c.l.s4 839922192
  %v1648 = vunpack.c.0.s8 %v1647
  %v1649 = vlaneseq
  %v1650 = vshrl.u32 %v1649, 7
  %v1651 = vsub.s32 %v1648, %v1650
  %v1652 = vrot.slane %v1644, %v1651
  %1654 = vset.pattern.permute.xlu0 0
  %1655 = vperm.xlu0 %1654, %v1357
  %v1656 = vpop.permute.xlu0 %1655
  %v1659 = vunpack.c.l.s4 839922192
  %v1660 = vunpack.c.0.s8 %v1659
  %v1661 = vlaneseq
  %v1662 = vshrl.u32 %v1661, 7
  %v1663 = vsub.s32 %v1660, %v1662
  %v1664 = vrot.slane %v1656, %v1663
  %1666 = vset.pattern.permute.xlu0 0
  %1667 = vperm.xlu0 %1666, %v1358
  %v1668 = vpop.permute.xlu0 %1667
  %v1671 = vunpack.c.l.s4 839922192
  %v1672 = vunpack.c.0.s8 %v1671
  %v1673 = vlaneseq
  %v1674 = vshrl.u32 %v1673, 7
  %v1675 = vsub.s32 %v1672, %v1674
  %v1676 = vrot.slane %v1668, %v1675
  %1678 = vset.pattern.permute.xlu0 0
  %1679 = vperm.xlu0 %1678, %v1359
  %v1680 = vpop.permute.xlu0 %1679
  %v1683 = vunpack.c.l.s4 839922192
  %v1684 = vunpack.c.0.s8 %v1683
  %v1685 = vlaneseq
  %v1686 = vshrl.u32 %v1685, 7
  %v1687 = vsub.s32 %v1684, %v1686
  %v1688 = vrot.slane %v1680, %v1687
  %1690 = vset.pattern.permute.xlu0 0
  %1691 = vperm.xlu0 %1690, %v1360
  %v1692 = vpop.permute.xlu0 %1691
  %v1695 = vunpack.c.l.s4 839922192
  %v1696 = vunpack.c.0.s8 %v1695
  %v1697 = vlaneseq
  %v1698 = vshrl.u32 %v1697, 7
  %v1699 = vsub.s32 %v1696, %v1698
  %v1700 = vrot.slane %v1692, %v1699
  %1702 = vset.pattern.permute.xlu0 0
  %1703 = vperm.xlu0 %1702, %v1361
  %v1704 = vpop.permute.xlu0 %1703
  %v1707 = vunpack.c.l.s4 839922192
  %v1708 = vunpack.c.0.s8 %v1707
  %v1709 = vlaneseq
  %v1710 = vshrl.u32 %v1709, 7
  %v1711 = vsub.s32 %v1708, %v1710
  %v1712 = vrot.slane %v1704, %v1711
  %1714 = vset.pattern.permute.xlu0 0
  %1715 = vperm.xlu0 %1714, %v1362
  %v1716 = vpop.permute.xlu0 %1715
  %v1719 = vunpack.c.l.s4 839922192
  %v1720 = vunpack.c.0.s8 %v1719
  %v1721 = vlaneseq
  %v1722 = vshrl.u32 %v1721, 7
  %v1723 = vsub.s32 %v1720, %v1722
  %v1724 = vrot.slane %v1716, %v1723
  %1726 = vset.pattern.permute.xlu0 0
  %1727 = vperm.xlu0 %1726, %v1363
  %v1728 = vpop.permute.xlu0 %1727
  %v1731 = vunpack.c.l.s4 839922192
  %v1732 = vunpack.c.0.s8 %v1731
  %v1733 = vlaneseq
  %v1734 = vshrl.u32 %v1733, 7
  %v1735 = vsub.s32 %v1732, %v1734
  %v1736 = vrot.slane %v1728, %v1735
  %1738 = vset.pattern.permute.xlu0 0
  %1739 = vperm.xlu0 %1738, %v1364
  %v1740 = vpop.permute.xlu0 %1739
  %v1743 = vunpack.c.l.s4 839922192
  %v1744 = vunpack.c.0.s8 %v1743
  %v1745 = vlaneseq
  %v1746 = vshrl.u32 %v1745, 7
  %v1747 = vsub.s32 %v1744, %v1746
  %v1748 = vrot.slane %v1740, %v1747
  %v1781 = vunpack.c.l.b16 %v1376
  %v1782 = vunpack.c.l.b16 %v1388
  %v1783 = vunpack.c.l.b16 %v1400
  %v1784 = vunpack.c.l.b16 %v1412
  %v1785 = vunpack.c.l.b16 %v1424
  %v1786 = vunpack.c.l.b16 %v1436
  %v1787 = vunpack.c.l.b16 %v1448
  %v1788 = vunpack.c.l.b16 %v1460
  %v1789 = vunpack.c.l.b16 %v1472
  %v1790 = vunpack.c.l.b16 %v1484
  %v1791 = vunpack.c.l.b16 %v1496
  %v1792 = vunpack.c.l.b16 %v1508
  %v1793 = vunpack.c.l.b16 %v1520
  %v1794 = vunpack.c.l.b16 %v1532
  %v1795 = vunpack.c.l.b16 %v1544
  %v1796 = vunpack.c.l.b16 %v1556
  %v1797 = vunpack.c.l.b16 %v1568
  %v1798 = vunpack.c.l.b16 %v1580
  %v1799 = vunpack.c.l.b16 %v1592
  %v1800 = vunpack.c.l.b16 %v1604
  %v1801 = vunpack.c.l.b16 %v1616
  %v1802 = vunpack.c.l.b16 %v1628
  %v1803 = vunpack.c.l.b16 %v1640
  %v1804 = vunpack.c.l.b16 %v1652
  %v1805 = vunpack.c.l.b16 %v1664
  %v1806 = vunpack.c.l.b16 %v1676
  %v1807 = vunpack.c.l.b16 %v1688
  %v1808 = vunpack.c.l.b16 %v1700
  %v1809 = vunpack.c.l.b16 %v1712
  %v1810 = vunpack.c.l.b16 %v1724
  %v1811 = vunpack.c.l.b16 %v1736
  %v1812 = vunpack.c.l.b16 %v1748
  %v1813 = vpack.c.b16 %v1782, %v1781
  %v1814 = vpack.c.b16 %v1784, %v1783
  %v1815 = vpack.c.b16 %v1786, %v1785
  %v1816 = vpack.c.b16 %v1788, %v1787
  %v1817 = vpack.c.b16 %v1790, %v1789
  %v1818 = vpack.c.b16 %v1792, %v1791
  %v1819 = vpack.c.b16 %v1794, %v1793
  %v1820 = vpack.c.b16 %v1796, %v1795
  %v1821 = vpack.c.b16 %v1798, %v1797
  %v1822 = vpack.c.b16 %v1800, %v1799
  %v1823 = vpack.c.b16 %v1802, %v1801
  %v1824 = vpack.c.b16 %v1804, %v1803
  %v1825 = vpack.c.b16 %v1806, %v1805
  %v1826 = vpack.c.b16 %v1808, %v1807
  %v1827 = vpack.c.b16 %v1810, %v1809
  %v1828 = vpack.c.b16 %v1812, %v1811
  %v1845 = vadd.bf16 %v1317, %v1813
  %v1846 = vadd.bf16 %v1318, %v1814
  %v1847 = vadd.bf16 %v1319, %v1815
  %v1848 = vadd.bf16 %v1320, %v1816
  %v1849 = vadd.bf16 %v1321, %v1817
  %v1850 = vadd.bf16 %v1322, %v1818
  %v1851 = vadd.bf16 %v1323, %v1819
  %v1852 = vadd.bf16 %v1324, %v1820
  %v1853 = vadd.bf16 %v1325, %v1821
  %v1854 = vadd.bf16 %v1326, %v1822
  %v1855 = vadd.bf16 %v1327, %v1823
  %v1856 = vadd.bf16 %v1328, %v1824
  %v1857 = vadd.bf16 %v1329, %v1825
  %v1858 = vadd.bf16 %v1330, %v1826
  %v1859 = vadd.bf16 %v1331, %v1827
  %v1860 = vadd.bf16 %v1332, %v1828
  %v1861 = vmax.bf16 %v1845, 0
  %v1862 = vmax.bf16 %v1846, 0
  %v1863 = vmax.bf16 %v1847, 0
  %v1864 = vmax.bf16 %v1848, 0
  %v1865 = vmax.bf16 %v1849, 0
  %v1866 = vmax.bf16 %v1850, 0
  %v1867 = vmax.bf16 %v1851, 0
  %v1868 = vmax.bf16 %v1852, 0
  %v1869 = vmax.bf16 %v1853, 0
  %v1870 = vmax.bf16 %v1854, 0
  %v1871 = vmax.bf16 %v1855, 0
  %v1872 = vmax.bf16 %v1856, 0
  %v1873 = vmax.bf16 %v1857, 0
  %v1874 = vmax.bf16 %v1858, 0
  %v1875 = vmax.bf16 %v1859, 0
  %v1876 = vmax.bf16 %v1860, 0
  %v1877 = vld [vmem:[%s5] sm:$0xff]
  %v1878 = vld [vmem:[%s5 + $0x8] sm:$0xff]
  %v1879 = vld [vmem:[%s5 + $0x10] sm:$0xff]
  %v1880 = vld [vmem:[%s5 + $0x18] sm:$0xff]
  %v1881 = vld [vmem:[%s5 + $0x20] sm:$0xff]
  %v1882 = vld [vmem:[%s5 + $0x28] sm:$0xff]
  %v1883 = vld [vmem:[%s5 + $0x30] sm:$0xff]
  %v1884 = vld [vmem:[%s5 + $0x38] sm:$0xff]
  %v1885 = vld [vmem:[%s5 + $0x40] sm:$0xff]
  %v1886 = vld [vmem:[%s5 + $0x48] sm:$0xff]
  %v1887 = vld [vmem:[%s5 + $0x50] sm:$0xff]
  %v1888 = vld [vmem:[%s5 + $0x58] sm:$0xff]
  %v1889 = vld [vmem:[%s5 + $0x60] sm:$0xff]
  %v1890 = vld [vmem:[%s5 + $0x68] sm:$0xff]
  %v1891 = vld [vmem:[%s5 + $0x70] sm:$0xff]
  %v1892 = vld [vmem:[%s5 + $0x78] sm:$0xff]
  %v1893 = vld [vmem:[%s5 + $0x80] sm:$0xff]
  %v1894 = vld [vmem:[%s5 + $0x88] sm:$0xff]
  %v1895 = vld [vmem:[%s5 + $0x90] sm:$0xff]
  %v1896 = vld [vmem:[%s5 + $0x98] sm:$0xff]
  %v1897 = vld [vmem:[%s5 + $0xa0] sm:$0xff]
  %v1898 = vld [vmem:[%s5 + $0xa8] sm:$0xff]
  %v1899 = vld [vmem:[%s5 + $0xb0] sm:$0xff]
  %v1900 = vld [vmem:[%s5 + $0xb8] sm:$0xff]
  %v1901 = vld [vmem:[%s5 + $0xc0] sm:$0xff]
  %v1902 = vld [vmem:[%s5 + $0xc8] sm:$0xff]
  %v1903 = vld [vmem:[%s5 + $0xd0] sm:$0xff]
  %v1904 = vld [vmem:[%s5 + $0xd8] sm:$0xff]
  %v1905 = vld [vmem:[%s5 + $0xe0] sm:$0xff]
  %v1906 = vld [vmem:[%s5 + $0xe8] sm:$0xff]
  %v1907 = vld [vmem:[%s5 + $0xf0] sm:$0xff]
  %v1908 = vld [vmem:[%s5 + $0xf8] sm:$0xff]
  %v1941 = vunpack.c.l.b16 %v1877
  %v1942 = vunpack.c.h.b16 %v1877
  %v1943 = vunpack.c.l.b16 %v1878
  %v1944 = vunpack.c.h.b16 %v1878
  %v1945 = vunpack.c.l.b16 %v1879
  %v1946 = vunpack.c.h.b16 %v1879
  %v1947 = vunpack.c.l.b16 %v1880
  %v1948 = vunpack.c.h.b16 %v1880
  %v1949 = vunpack.c.l.b16 %v1881
  %v1950 = vunpack.c.h.b16 %v1881
  %v1951 = vunpack.c.l.b16 %v1882
  %v1952 = vunpack.c.h.b16 %v1882
  %v1953 = vunpack.c.l.b16 %v1883
  %v1954 = vunpack.c.h.b16 %v1883
  %v1955 = vunpack.c.l.b16 %v1884
  %v1956 = vunpack.c.h.b16 %v1884
  %v1957 = vunpack.c.l.b16 %v1885
  %v1958 = vunpack.c.h.b16 %v1885
  %v1959 = vunpack.c.l.b16 %v1886
  %v1960 = vunpack.c.h.b16 %v1886
  %v1961 = vunpack.c.l.b16 %v1887
  %v1962 = vunpack.c.h.b16 %v1887
  %v1963 = vunpack.c.l.b16 %v1888
  %v1964 = vunpack.c.h.b16 %v1888
  %v1965 = vunpack.c.l.b16 %v1889
  %v1966 = vunpack.c.h.b16 %v1889
  %v1967 = vunpack.c.l.b16 %v1890
  %v1968 = vunpack.c.h.b16 %v1890
  %v1969 = vunpack.c.l.b16 %v1891
  %v1970 = vunpack.c.h.b16 %v1891
  %v1971 = vunpack.c.l.b16 %v1892
  %v1972 = vunpack.c.h.b16 %v1892
  %v1973 = vunpack.c.l.b16 %v1893
  %v1974 = vunpack.c.h.b16 %v1893
  %v1975 = vunpack.c.l.b16 %v1894
  %v1976 = vunpack.c.h.b16 %v1894
  %v1977 = vunpack.c.l.b16 %v1895
  %v1978 = vunpack.c.h.b16 %v1895
  %v1979 = vunpack.c.l.b16 %v1896
  %v1980 = vunpack.c.h.b16 %v1896
  %v1981 = vunpack.c.l.b16 %v1897
  %v1982 = vunpack.c.h.b16 %v1897
  %v1983 = vunpack.c.l.b16 %v1898
  %v1984 = vunpack.c.h.b16 %v1898
  %v1985 = vunpack.c.l.b16 %v1899
  %v1986 = vunpack.c.h.b16 %v1899
  %v1987 = vunpack.c.l.b16 %v1900
  %v1988 = vunpack.c.h.b16 %v1900
  %v1989 = vunpack.c.l.b16 %v1901
  %v1990 = vunpack.c.h.b16 %v1901
  %v1991 = vunpack.c.l.b16 %v1902
  %v1992 = vunpack.c.h.b16 %v1902
  %v1993 = vunpack.c.l.b16 %v1903
  %v1994 = vunpack.c.h.b16 %v1903
  %v1995 = vunpack.c.l.b16 %v1904
  %v1996 = vunpack.c.h.b16 %v1904
  %v1997 = vunpack.c.l.b16 %v1905
  %v1998 = vunpack.c.h.b16 %v1905
  %v1999 = vunpack.c.l.b16 %v1906
  %v2000 = vunpack.c.h.b16 %v1906
  %v2001 = vunpack.c.l.b16 %v1907
  %v2002 = vunpack.c.h.b16 %v1907
  %v2003 = vunpack.c.l.b16 %v1908
  %v2004 = vunpack.c.h.b16 %v1908
  %v2005 = vpack.c.b16 %v1943, %v1941
  %v2006 = vpack.c.b16 %v1944, %v1942
  %v2007 = vpack.c.b16 %v1947, %v1945
  %v2008 = vpack.c.b16 %v1948, %v1946
  %v2009 = vpack.c.b16 %v1951, %v1949
  %v2010 = vpack.c.b16 %v1952, %v1950
  %v2011 = vpack.c.b16 %v1955, %v1953
  %v2012 = vpack.c.b16 %v1956, %v1954
  %v2013 = vpack.c.b16 %v1959, %v1957
  %v2014 = vpack.c.b16 %v1960, %v1958
  %v2015 = vpack.c.b16 %v1963, %v1961
  %v2016 = vpack.c.b16 %v1964, %v1962
  %v2017 = vpack.c.b16 %v1967, %v1965
  %v2018 = vpack.c.b16 %v1968, %v1966
  %v2019 = vpack.c.b16 %v1971, %v1969
  %v2020 = vpack.c.b16 %v1972, %v1970
  %v2021 = vpack.c.b16 %v1975, %v1973
  %v2022 = vpack.c.b16 %v1976, %v1974
  %v2023 = vpack.c.b16 %v1979, %v1977
  %v2024 = vpack.c.b16 %v1980, %v1978
  %v2025 = vpack.c.b16 %v1983, %v1981
  %v2026 = vpack.c.b16 %v1984, %v1982
  %v2027 = vpack.c.b16 %v1987, %v1985
  %v2028 = vpack.c.b16 %v1988, %v1986
  %v2029 = vpack.c.b16 %v1991, %v1989
  %v2030 = vpack.c.b16 %v1992, %v1990
  %v2031 = vpack.c.b16 %v1995, %v1993
  %v2032 = vpack.c.b16 %v1996, %v1994
  %v2033 = vpack.c.b16 %v1999, %v1997
  %v2034 = vpack.c.b16 %v2000, %v1998
  %v2035 = vpack.c.b16 %v2003, %v2001
  %v2036 = vpack.c.b16 %v2004, %v2002
  %2069 = vmatprep.subr.bf16.mxu0 0
  %2070 = vmatpush1.bf16.msra.mxu0 %v1861
  %2071 = vmatprep.subr.bf16.mxu0 0
  %2072 = vmatpush1.bf16.msra.mxu0 %v1862
  %2073 = vmatprep.subr.bf16.mxu0 0
  %2074 = vmatpush1.bf16.msra.mxu0 %v1863
  %2075 = vmatprep.subr.bf16.mxu0 0
  %2076 = vmatpush1.bf16.msra.mxu0 %v1864
  %2077 = vmatprep.subr.bf16.mxu0 0
  %2078 = vmatpush1.bf16.msra.mxu0 %v1865
  %2079 = vmatprep.subr.bf16.mxu0 0
  %2080 = vmatpush1.bf16.msra.mxu0 %v1866
  %2081 = vmatprep.subr.bf16.mxu0 0
  %2082 = vmatpush1.bf16.msra.mxu0 %v1867
  %2083 = vmatprep.subr.bf16.mxu0 0
  %2084 = vmatpush1.bf16.msra.mxu0 %v1868
  %2085 = vmatprep.subr.bf16.mxu0 0
  %2086 = vmatpush1.bf16.msra.mxu0 %v1869
  %2087 = vmatprep.subr.bf16.mxu0 0
  %2088 = vmatpush1.bf16.msra.mxu0 %v1870
  %2089 = vmatprep.subr.bf16.mxu0 0
  %2090 = vmatpush1.bf16.msra.mxu0 %v1871
  %2091 = vmatprep.subr.bf16.mxu0 0
  %2092 = vmatpush1.bf16.msra.mxu0 %v1872
  %2093 = vmatprep.subr.bf16.mxu0 0
  %2094 = vmatpush1.bf16.msra.mxu0 %v1873
  %2095 = vmatprep.subr.bf16.mxu0 0
  %2096 = vmatpush1.bf16.msra.mxu0 %v1874
  %2097 = vmatprep.subr.bf16.mxu0 0
  %2098 = vmatpush1.bf16.msra.mxu0 %v1875
  %2099 = vmatprep.subr.bf16.mxu0 0
  %2100 = vmatpush1.bf16.msra.mxu0 %v1876
  %2101 = vmatprep.mubr.bf16.mxu0 %v2006
  %2102 = vmatmul.mubr.bf16.gmra.mrb[0].mxu0 %v2005
  %v2103 = vpop.f32.mrb[0].mxu0
  %v2104 = vadd.f32 0.0, %v2103
  %v2105 = vpop.f32.mrb[0].mxu0
  %v2106 = vpop.f32.mrb[0].mxu0
  %v2107 = vadd.f32 0.0, %v2106
  %v2108 = vpop.f32.mrb[0].mxu0
  %2109 = vmatprep.mubr.bf16.mxu0 %v2008
  %2110 = vmatmul.mubr.bf16.gmra.mrb[0].mxu0 %v2007
  %v2111 = vpop.f32.mrb[0].mxu0
  %v2112 = vadd.f32 0.0, %v2111
  %v2113 = vpop.f32.mrb[0].mxu0
  %v2114 = vpop.f32.mrb[0].mxu0
  %v2115 = vadd.f32 0.0, %v2114
  %v2116 = vpop.f32.mrb[0].mxu0
  %2117 = vmatprep.mubr.bf16.mxu0 %v2010
  %2118 = vmatmul.mubr.bf16.gmra.mrb[0].mxu0 %v2009
  %v2119 = vpop.f32.mrb[0].mxu0
  %v2120 = vadd.f32 0.0, %v2119
  %v2121 = vpop.f32.mrb[0].mxu0
  %v2122 = vpop.f32.mrb[0].mxu0
  %v2123 = vadd.f32 0.0, %v2122
  %v2124 = vpop.f32.mrb[0].mxu0
  %2125 = vmatprep.mubr.bf16.mxu0 %v2012
  %2126 = vmatmul.mubr.bf16.gmra.mrb[0].mxu0 %v2011
  %v2127 = vpop.f32.mrb[0].mxu0
  %v2128 = vadd.f32 0.0, %v2127
  %v2129 = vpop.f32.mrb[0].mxu0
  %v2130 = vpop.f32.mrb[0].mxu0
  %v2131 = vadd.f32 0.0, %v2130
  %v2132 = vpop.f32.mrb[0].mxu0
  %2133 = vmatprep.mubr.bf16.mxu0 %v2014
  %2134 = vmatmul.mubr.bf16.gmra.mrb[0].mxu0 %v2013
  %v2135 = vpop.f32.mrb[0].mxu0
  %v2136 = vadd.f32 0.0, %v2135
  %v2137 = vpop.f32.mrb[0].mxu0
  %v2138 = vpop.f32.mrb[0].mxu0
  %v2139 = vadd.f32 0.0, %v2138
  %v2140 = vpop.f32.mrb[0].mxu0
  %2141 = vmatprep.mubr.bf16.mxu0 %v2016
  %2142 = vmatmul.mubr.bf16.gmra.mrb[0].mxu0 %v2015
  %v2143 = vpop.f32.mrb[0].mxu0
  %v2144 = vadd.f32 0.0, %v2143
  %v2145 = vpop.f32.mrb[0].mxu0
  %v2146 = vpop.f32.mrb[0].mxu0
  %v2147 = vadd.f32 0.0, %v2146
  %v2148 = vpop.f32.mrb[0].mxu0
  %2149 = vmatprep.mubr.bf16.mxu0 %v2018
  %2150 = vmatmul.mubr.bf16.gmra.mrb[0].mxu0 %v2017
  %v2151 = vpop.f32.mrb[0].mxu0
  %v2152 = vadd.f32 0.0, %v2151
  %v2153 = vpop.f32.mrb[0].mxu0
  %v2154 = vpop.f32.mrb[0].mxu0
  %v2155 = vadd.f32 0.0, %v2154
  %v2156 = vpop.f32.mrb[0].mxu0
  %2157 = vmatprep.mubr.bf16.mxu0 %v2020
  %2158 = vmatmul.mubr.bf16.gmra.mrb[0].mxu0 %v2019
  %v2159 = vpop.f32.mrb[0].mxu0
  %v2160 = vadd.f32 0.0, %v2159
  %v2161 = vpop.f32.mrb[0].mxu0
  %v2162 = vpop.f32.mrb[0].mxu0
  %v2163 = vadd.f32 0.0, %v2162
  %v2164 = vpop.f32.mrb[0].mxu0
  %2165 = vmatprep.mubr.bf16.mxu0 %v2022
  %2166 = vmatmul.mubr.bf16.gmra.mrb[0].mxu0 %v2021
  %v2167 = vpop.f32.mrb[0].mxu0
  %v2168 = vadd.f32 0.0, %v2167
  %v2169 = vpop.f32.mrb[0].mxu0
  %v2170 = vpop.f32.mrb[0].mxu0
  %v2171 = vadd.f32 0.0, %v2170
  %v2172 = vpop.f32.mrb[0].mxu0
  %2173 = vmatprep.mubr.bf16.mxu0 %v2024
  %2174 = vmatmul.mubr.bf16.gmra.mrb[0].mxu0 %v2023
  %v2175 = vpop.f32.mrb[0].mxu0
  %v2176 = vadd.f32 0.0, %v2175
  %v2177 = vpop.f32.mrb[0].mxu0
  %v2178 = vpop.f32.mrb[0].mxu0
  %v2179 = vadd.f32 0.0, %v2178
  %v2180 = vpop.f32.mrb[0].mxu0
  %2181 = vmatprep.mubr.bf16.mxu0 %v2026
  %2182 = vmatmul.mubr.bf16.gmra.mrb[0].mxu0 %v2025
  %v2183 = vpop.f32.mrb[0].mxu0
  %v2184 = vadd.f32 0.0, %v2183
  %v2185 = vpop.f32.mrb[0].mxu0
  %v2186 = vpop.f32.mrb[0].mxu0
  %v2187 = vadd.f32 0.0, %v2186
  %v2188 = vpop.f32.mrb[0].mxu0
  %2189 = vmatprep.mubr.bf16.mxu0 %v2028
  %2190 = vmatmul.mubr.bf16.gmra.mrb[0].mxu0 %v2027
  %v2191 = vpop.f32.mrb[0].mxu0
  %v2192 = vadd.f32 0.0, %v2191
  %v2193 = vpop.f32.mrb[0].mxu0
  %v2194 = vpop.f32.mrb[0].mxu0
  %v2195 = vadd.f32 0.0, %v2194
  %v2196 = vpop.f32.mrb[0].mxu0
  %2197 = vmatprep.mubr.bf16.mxu0 %v2030
  %2198 = vmatmul.mubr.bf16.gmra.mrb[0].mxu0 %v2029
  %v2199 = vpop.f32.mrb[0].mxu0
  %v2200 = vadd.f32 0.0, %v2199
  %v2201 = vpop.f32.mrb[0].mxu0
  %v2202 = vpop.f32.mrb[0].mxu0
  %v2203 = vadd.f32 0.0, %v2202
  %v2204 = vpop.f32.mrb[0].mxu0
  %2205 = vmatprep.mubr.bf16.mxu0 %v2032
  %2206 = vmatmul.mubr.bf16.gmra.mrb[0].mxu0 %v2031
  %v2207 = vpop.f32.mrb[0].mxu0
  %v2208 = vadd.f32 0.0, %v2207
  %v2209 = vpop.f32.mrb[0].mxu0
  %v2210 = vpop.f32.mrb[0].mxu0
  %v2211 = vadd.f32 0.0, %v2210
  %v2212 = vpop.f32.mrb[0].mxu0
  %2213 = vmatprep.mubr.bf16.mxu0 %v2034
  %2214 = vmatmul.mubr.bf16.gmra.mrb[0].mxu0 %v2033
  %v2215 = vpop.f32.mrb[0].mxu0
  %v2216 = vadd.f32 0.0, %v2215
  %v2217 = vpop.f32.mrb[0].mxu0
  %v2218 = vpop.f32.mrb[0].mxu0
  %v2219 = vadd.f32 0.0, %v2218
  %v2220 = vpop.f32.mrb[0].mxu0
  %2221 = vmatprep.mubr.bf16.mxu0 %v2036
  %2222 = vmatmul.mubr.bf16.gmra.mrb[0].mxu0 %v2035
  %v2223 = vpop.f32.mrb[0].mxu0
  %v2224 = vadd.f32 0.0, %v2223
  %v2225 = vpop.f32.mrb[0].mxu0
  %v2226 = vpop.f32.mrb[0].mxu0
  %v2227 = vadd.f32 0.0, %v2226
  %v2228 = vpop.f32.mrb[0].mxu0
  %2229 = vdwg.mxu0
  %v2230 = vpack.c.bf16 %v2107, %v2104
  %v2231 = vpack.c.bf16 %v2115, %v2112
  %v2232 = vpack.c.bf16 %v2123, %v2120
  %v2233 = vpack.c.bf16 %v2131, %v2128
  %v2234 = vpack.c.bf16 %v2139, %v2136
  %v2235 = vpack.c.bf16 %v2147, %v2144
  %v2236 = vpack.c.bf16 %v2155, %v2152
  %v2237 = vpack.c.bf16 %v2163, %v2160
  %v2238 = vpack.c.bf16 %v2171, %v2168
  %v2239 = vpack.c.bf16 %v2179, %v2176
  %v2240 = vpack.c.bf16 %v2187, %v2184
  %v2241 = vpack.c.bf16 %v2195, %v2192
  %v2242 = vpack.c.bf16 %v2203, %v2200
  %v2243 = vpack.c.bf16 %v2211, %v2208
  %v2244 = vpack.c.bf16 %v2219, %v2216
  %v2245 = vpack.c.bf16 %v2227, %v2224
  %v2246 = vld [vmem:[%s6] sm:$0xf]
  %v2247 = vld [vmem:[%s6 + $0x4] sm:$0xf]
  %v2248 = vld [vmem:[%s6 + $0x8] sm:$0xf]
  %v2249 = vld [vmem:[%s6 + $0xc] sm:$0xf]
  %v2250 = vld [vmem:[%s6 + $0x10] sm:$0xf]
  %v2251 = vld [vmem:[%s6 + $0x14] sm:$0xf]
  %v2252 = vld [vmem:[%s6 + $0x18] sm:$0xf]
  %v2253 = vld [vmem:[%s6 + $0x1c] sm:$0xf]
  %v2254 = vld [vmem:[%s6 + $0x20] sm:$0xf]
  %v2255 = vld [vmem:[%s6 + $0x24] sm:$0xf]
  %v2256 = vld [vmem:[%s6 + $0x28] sm:$0xf]
  %v2257 = vld [vmem:[%s6 + $0x2c] sm:$0xf]
  %v2258 = vld [vmem:[%s6 + $0x30] sm:$0xf]
  %v2259 = vld [vmem:[%s6 + $0x34] sm:$0xf]
  %v2260 = vld [vmem:[%s6 + $0x38] sm:$0xf]
  %v2261 = vld [vmem:[%s6 + $0x3c] sm:$0xf]
  %v2262 = vld [vmem:[%s6 + $0x40] sm:$0xf]
  %v2263 = vld [vmem:[%s6 + $0x44] sm:$0xf]
  %v2264 = vld [vmem:[%s6 + $0x48] sm:$0xf]
  %v2265 = vld [vmem:[%s6 + $0x4c] sm:$0xf]
  %v2266 = vld [vmem:[%s6 + $0x50] sm:$0xf]
  %v2267 = vld [vmem:[%s6 + $0x54] sm:$0xf]
  %v2268 = vld [vmem:[%s6 + $0x58] sm:$0xf]
  %v2269 = vld [vmem:[%s6 + $0x5c] sm:$0xf]
  %v2270 = vld [vmem:[%s6 + $0x60] sm:$0xf]
  %v2271 = vld [vmem:[%s6 + $0x64] sm:$0xf]
  %v2272 = vld [vmem:[%s6 + $0x68] sm:$0xf]
  %v2273 = vld [vmem:[%s6 + $0x6c] sm:$0xf]
  %v2274 = vld [vmem:[%s6 + $0x70] sm:$0xf]
  %v2275 = vld [vmem:[%s6 + $0x74] sm:$0xf]
  %v2276 = vld [vmem:[%s6 + $0x78] sm:$0xf]
  %v2277 = vld [vmem:[%s6 + $0x7c] sm:$0xf]
  %2279 = vset.pattern.permute.xlu0 0
  %2280 = vperm.xlu0 %2279, %v2246
  %v2281 = vpop.permute.xlu0 %2280
  %v2284 = vunpack.c.l.s4 839922192
  %v2285 = vunpack.c.0.s8 %v2284
  %v2286 = vlaneseq
  %v2287 = vshrl.u32 %v2286, 7
  %v2288 = vsub.s32 %v2285, %v2287
  %v2289 = vrot.slane %v2281, %v2288
  %2291 = vset.pattern.permute.xlu0 0
  %2292 = vperm.xlu0 %2291, %v2247
  %v2293 = vpop.permute.xlu0 %2292
  %v2296 = vunpack.c.l.s4 839922192
  %v2297 = vunpack.c.0.s8 %v2296
  %v2298 = vlaneseq
  %v2299 = vshrl.u32 %v2298, 7
  %v2300 = vsub.s32 %v2297, %v2299
  %v2301 = vrot.slane %v2293, %v2300
  %2303 = vset.pattern.permute.xlu0 0
  %2304 = vperm.xlu0 %2303, %v2248
  %v2305 = vpop.permute.xlu0 %2304
  %v2308 = vunpack.c.l.s4 839922192
  %v2309 = vunpack.c.0.s8 %v2308
  %v2310 = vlaneseq
  %v2311 = vshrl.u32 %v2310, 7
  %v2312 = vsub.s32 %v2309, %v2311
  %v2313 = vrot.slane %v2305, %v2312
  %2315 = vset.pattern.permute.xlu0 0
  %2316 = vperm.xlu0 %2315, %v2249
  %v2317 = vpop.permute.xlu0 %2316
  %v2320 = vunpack.c.l.s4 839922192
  %v2321 = vunpack.c.0.s8 %v2320
  %v2322 = vlaneseq
  %v2323 = vshrl.u32 %v2322, 7
  %v2324 = vsub.s32 %v2321, %v2323
  %v2325 = vrot.slane %v2317, %v2324
  %2327 = vset.pattern.permute.xlu0 0
  %2328 = vperm.xlu0 %2327, %v2250
  %v2329 = vpop.permute.xlu0 %2328
  %v2332 = vunpack.c.l.s4 839922192
  %v2333 = vunpack.c.0.s8 %v2332
  %v2334 = vlaneseq
  %v2335 = vshrl.u32 %v2334, 7
  %v2336 = vsub.s32 %v2333, %v2335
  %v2337 = vrot.slane %v2329, %v2336
  %2339 = vset.pattern.permute.xlu0 0
  %2340 = vperm.xlu0 %2339, %v2251
  %v2341 = vpop.permute.xlu0 %2340
  %v2344 = vunpack.c.l.s4 839922192
  %v2345 = vunpack.c.0.s8 %v2344
  %v2346 = vlaneseq
  %v2347 = vshrl.u32 %v2346, 7
  %v2348 = vsub.s32 %v2345, %v2347
  %v2349 = vrot.slane %v2341, %v2348
  %2351 = vset.pattern.permute.xlu0 0
  %2352 = vperm.xlu0 %2351, %v2252
  %v2353 = vpop.permute.xlu0 %2352
  %v2356 = vunpack.c.l.s4 839922192
  %v2357 = vunpack.c.0.s8 %v2356
  %v2358 = vlaneseq
  %v2359 = vshrl.u32 %v2358, 7
  %v2360 = vsub.s32 %v2357, %v2359
  %v2361 = vrot.slane %v2353, %v2360
  %2363 = vset.pattern.permute.xlu0 0
  %2364 = vperm.xlu0 %2363, %v2253
  %v2365 = vpop.permute.xlu0 %2364
  %v2368 = vunpack.c.l.s4 839922192
  %v2369 = vunpack.c.0.s8 %v2368
  %v2370 = vlaneseq
  %v2371 = vshrl.u32 %v2370, 7
  %v2372 = vsub.s32 %v2369, %v2371
  %v2373 = vrot.slane %v2365, %v2372
  %2375 = vset.pattern.permute.xlu0 0
  %2376 = vperm.xlu0 %2375, %v2254
  %v2377 = vpop.permute.xlu0 %2376
  %v2380 = vunpack.c.l.s4 839922192
  %v2381 = vunpack.c.0.s8 %v2380
  %v2382 = vlaneseq
  %v2383 = vshrl.u32 %v2382, 7
  %v2384 = vsub.s32 %v2381, %v2383
  %v2385 = vrot.slane %v2377, %v2384
  %2387 = vset.pattern.permute.xlu0 0
  %2388 = vperm.xlu0 %2387, %v2255
  %v2389 = vpop.permute.xlu0 %2388
  %v2392 = vunpack.c.l.s4 839922192
  %v2393 = vunpack.c.0.s8 %v2392
  %v2394 = vlaneseq
  %v2395 = vshrl.u32 %v2394, 7
  %v2396 = vsub.s32 %v2393, %v2395
  %v2397 = vrot.slane %v2389, %v2396
  %2399 = vset.pattern.permute.xlu0 0
  %2400 = vperm.xlu0 %2399, %v2256
  %v2401 = vpop.permute.xlu0 %2400
  %v2404 = vunpack.c.l.s4 839922192
  %v2405 = vunpack.c.0.s8 %v2404
  %v2406 = vlaneseq
  %v2407 = vshrl.u32 %v2406, 7
  %v2408 = vsub.s32 %v2405, %v2407
  %v2409 = vrot.slane %v2401, %v2408
  %2411 = vset.pattern.permute.xlu0 0
  %2412 = vperm.xlu0 %2411, %v2257
  %v2413 = vpop.permute.xlu0 %2412
  %v2416 = vunpack.c.l.s4 839922192
  %v2417 = vunpack.c.0.s8 %v2416
  %v2418 = vlaneseq
  %v2419 = vshrl.u32 %v2418, 7
  %v2420 = vsub.s32 %v2417, %v2419
  %v2421 = vrot.slane %v2413, %v2420
  %2423 = vset.pattern.permute.xlu0 0
  %2424 = vperm.xlu0 %2423, %v2258
  %v2425 = vpop.permute.xlu0 %2424
  %v2428 = vunpack.c.l.s4 839922192
  %v2429 = vunpack.c.0.s8 %v2428
  %v2430 = vlaneseq
  %v2431 = vshrl.u32 %v2430, 7
  %v2432 = vsub.s32 %v2429, %v2431
  %v2433 = vrot.slane %v2425, %v2432
  %2435 = vset.pattern.permute.xlu0 0
  %2436 = vperm.xlu0 %2435, %v2259
  %v2437 = vpop.permute.xlu0 %2436
  %v2440 = vunpack.c.l.s4 839922192
  %v2441 = vunpack.c.0.s8 %v2440
  %v2442 = vlaneseq
  %v2443 = vshrl.u32 %v2442, 7
  %v2444 = vsub.s32 %v2441, %v2443
  %v2445 = vrot.slane %v2437, %v2444
  %2447 = vset.pattern.permute.xlu0 0
  %2448 = vperm.xlu0 %2447, %v2260
  %v2449 = vpop.permute.xlu0 %2448
  %v2452 = vunpack.c.l.s4 839922192
  %v2453 = vunpack.c.0.s8 %v2452
  %v2454 = vlaneseq
  %v2455 = vshrl.u32 %v2454, 7
  %v2456 = vsub.s32 %v2453, %v2455
  %v2457 = vrot.slane %v2449, %v2456
  %2459 = vset.pattern.permute.xlu0 0
  %2460 = vperm.xlu0 %2459, %v2261
  %v2461 = vpop.permute.xlu0 %2460
  %v2464 = vunpack.c.l.s4 839922192
  %v2465 = vunpack.c.0.s8 %v2464
  %v2466 = vlaneseq
  %v2467 = vshrl.u32 %v2466, 7
  %v2468 = vsub.s32 %v2465, %v2467
  %v2469 = vrot.slane %v2461, %v2468
  %2471 = vset.pattern.permute.xlu0 0
  %2472 = vperm.xlu0 %2471, %v2262
  %v2473 = vpop.permute.xlu0 %2472
  %v2476 = vunpack.c.l.s4 839922192
  %v2477 = vunpack.c.0.s8 %v2476
  %v2478 = vlaneseq
  %v2479 = vshrl.u32 %v2478, 7
  %v2480 = vsub.s32 %v2477, %v2479
  %v2481 = vrot.slane %v2473, %v2480
  %2483 = vset.pattern.permute.xlu0 0
  %2484 = vperm.xlu0 %2483, %v2263
  %v2485 = vpop.permute.xlu0 %2484
  %v2488 = vunpack.c.l.s4 839922192
  %v2489 = vunpack.c.0.s8 %v2488
  %v2490 = vlaneseq
  %v2491 = vshrl.u32 %v2490, 7
  %v2492 = vsub.s32 %v2489, %v2491
  %v2493 = vrot.slane %v2485, %v2492
  %2495 = vset.pattern.permute.xlu0 0
  %2496 = vperm.xlu0 %2495, %v2264
  %v2497 = vpop.permute.xlu0 %2496
  %v2500 = vunpack.c.l.s4 839922192
  %v2501 = vunpack.c.0.s8 %v2500
  %v2502 = vlaneseq
  %v2503 = vshrl.u32 %v2502, 7
  %v2504 = vsub.s32 %v2501, %v2503
  %v2505 = vrot.slane %v2497, %v2504
  %2507 = vset.pattern.permute.xlu0 0
  %2508 = vperm.xlu0 %2507, %v2265
  %v2509 = vpop.permute.xlu0 %2508
  %v2512 = vunpack.c.l.s4 839922192
  %v2513 = vunpack.c.0.s8 %v2512
  %v2514 = vlaneseq
  %v2515 = vshrl.u32 %v2514, 7
  %v2516 = vsub.s32 %v2513, %v2515
  %v2517 = vrot.slane %v2509, %v2516
  %2519 = vset.pattern.permute.xlu0 0
  %2520 = vperm.xlu0 %2519, %v2266
  %v2521 = vpop.permute.xlu0 %2520
  %v2524 = vunpack.c.l.s4 839922192
  %v2525 = vunpack.c.0.s8 %v2524
  %v2526 = vlaneseq
  %v2527 = vshrl.u32 %v2526, 7
  %v2528 = vsub.s32 %v2525, %v2527
  %v2529 = vrot.slane %v2521, %v2528
  %2531 = vset.pattern.permute.xlu0 0
  %2532 = vperm.xlu0 %2531, %v2267
  %v2533 = vpop.permute.xlu0 %2532
  %v2536 = vunpack.c.l.s4 839922192
  %v2537 = vunpack.c.0.s8 %v2536
  %v2538 = vlaneseq
  %v2539 = vshrl.u32 %v2538, 7
  %v2540 = vsub.s32 %v2537, %v2539
  %v2541 = vrot.slane %v2533, %v2540
  %2543 = vset.pattern.permute.xlu0 0
  %2544 = vperm.xlu0 %2543, %v2268
  %v2545 = vpop.permute.xlu0 %2544
  %v2548 = vunpack.c.l.s4 839922192
  %v2549 = vunpack.c.0.s8 %v2548
  %v2550 = vlaneseq
  %v2551 = vshrl.u32 %v2550, 7
  %v2552 = vsub.s32 %v2549, %v2551
  %v2553 = vrot.slane %v2545, %v2552
  %2555 = vset.pattern.permute.xlu0 0
  %2556 = vperm.xlu0 %2555, %v2269
  %v2557 = vpop.permute.xlu0 %2556
  %v2560 = vunpack.c.l.s4 839922192
  %v2561 = vunpack.c.0.s8 %v2560
  %v2562 = vlaneseq
  %v2563 = vshrl.u32 %v2562, 7
  %v2564 = vsub.s32 %v2561, %v2563
  %v2565 = vrot.slane %v2557, %v2564
  %2567 = vset.pattern.permute.xlu0 0
  %2568 = vperm.xlu0 %2567, %v2270
  %v2569 = vpop.permute.xlu0 %2568
  %v2572 = vunpack.c.l.s4 839922192
  %v2573 = vunpack.c.0.s8 %v2572
  %v2574 = vlaneseq
  %v2575 = vshrl.u32 %v2574, 7
  %v2576 = vsub.s32 %v2573, %v2575
  %v2577 = vrot.slane %v2569, %v2576
  %2579 = vset.pattern.permute.xlu0 0
  %2580 = vperm.xlu0 %2579, %v2271
  %v2581 = vpop.permute.xlu0 %2580
  %v2584 = vunpack.c.l.s4 839922192
  %v2585 = vunpack.c.0.s8 %v2584
  %v2586 = vlaneseq
  %v2587 = vshrl.u32 %v2586, 7
  %v2588 = vsub.s32 %v2585, %v2587
  %v2589 = vrot.slane %v2581, %v2588
  %2591 = vset.pattern.permute.xlu0 0
  %2592 = vperm.xlu0 %2591, %v2272
  %v2593 = vpop.permute.xlu0 %2592
  %v2596 = vunpack.c.l.s4 839922192
  %v2597 = vunpack.c.0.s8 %v2596
  %v2598 = vlaneseq
  %v2599 = vshrl.u32 %v2598, 7
  %v2600 = vsub.s32 %v2597, %v2599
  %v2601 = vrot.slane %v2593, %v2600
  %2603 = vset.pattern.permute.xlu0 0
  %2604 = vperm.xlu0 %2603, %v2273
  %v2605 = vpop.permute.xlu0 %2604
  %v2608 = vunpack.c.l.s4 839922192
  %v2609 = vunpack.c.0.s8 %v2608
  %v2610 = vlaneseq
  %v2611 = vshrl.u32 %v2610, 7
  %v2612 = vsub.s32 %v2609, %v2611
  %v2613 = vrot.slane %v2605, %v2612
  %2615 = vset.pattern.permute.xlu0 0
  %2616 = vperm.xlu0 %2615, %v2274
  %v2617 = vpop.permute.xlu0 %2616
  %v2620 = vunpack.c.l.s4 839922192
  %v2621 = vunpack.c.0.s8 %v2620
  %v2622 = vlaneseq
  %v2623 = vshrl.u32 %v2622, 7
  %v2624 = vsub.s32 %v2621, %v2623
  %v2625 = vrot.slane %v2617, %v2624
  %2627 = vset.pattern.permute.xlu0 0
  %2628 = vperm.xlu0 %2627, %v2275
  %v2629 = vpop.permute.xlu0 %2628
  %v2632 = vunpack.c.l.s4 839922192
  %v2633 = vunpack.c.0.s8 %v2632
  %v2634 = vlaneseq
  %v2635 = vshrl.u32 %v2634, 7
  %v2636 = vsub.s32 %v2633, %v2635
  %v2637 = vrot.slane %v2629, %v2636
  %2639 = vset.pattern.permute.xlu0 0
  %2640 = vperm.xlu0 %2639, %v2276
  %v2641 = vpop.permute.xlu0 %2640
  %v2644 = vunpack.c.l.s4 839922192
  %v2645 = vunpack.c.0.s8 %v2644
  %v2646 = vlaneseq
  %v2647 = vshrl.u32 %v2646, 7
  %v2648 = vsub.s32 %v2645, %v2647
  %v2649 = vrot.slane %v2641, %v2648
  %2651 = vset.pattern.permute.xlu0 0
  %2652 = vperm.xlu0 %2651, %v2277
  %v2653 = vpop.permute.xlu0 %2652
  %v2656 = vunpack.c.l.s4 839922192
  %v2657 = vunpack.c.0.s8 %v2656
  %v2658 = vlaneseq
  %v2659 = vshrl.u32 %v2658, 7
  %v2660 = vsub.s32 %v2657, %v2659
  %v2661 = vrot.slane %v2653, %v2660
  %v2694 = vunpack.c.l.b16 %v2289
  %v2695 = vunpack.c.l.b16 %v2301
  %v2696 = vunpack.c.l.b16 %v2313
  %v2697 = vunpack.c.l.b16 %v2325
  %v2698 = vunpack.c.l.b16 %v2337
  %v2699 = vunpack.c.l.b16 %v2349
  %v2700 = vunpack.c.l.b16 %v2361
  %v2701 = vunpack.c.l.b16 %v2373
  %v2702 = vunpack.c.l.b16 %v2385
  %v2703 = vunpack.c.l.b16 %v2397
  %v2704 = vunpack.c.l.b16 %v2409
  %v2705 = vunpack.c.l.b16 %v2421
  %v2706 = vunpack.c.l.b16 %v2433
  %v2707 = vunpack.c.l.b16 %v2445
  %v2708 = vunpack.c.l.b16 %v2457
  %v2709 = vunpack.c.l.b16 %v2469
  %v2710 = vunpack.c.l.b16 %v2481
  %v2711 = vunpack.c.l.b16 %v2493
  %v2712 = vunpack.c.l.b16 %v2505
  %v2713 = vunpack.c.l.b16 %v2517
  %v2714 = vunpack.c.l.b16 %v2529
  %v2715 = vunpack.c.l.b16 %v2541
  %v2716 = vunpack.c.l.b16 %v2553
  %v2717 = vunpack.c.l.b16 %v2565
  %v2718 = vunpack.c.l.b16 %v2577
  %v2719 = vunpack.c.l.b16 %v2589
  %v2720 = vunpack.c.l.b16 %v2601
  %v2721 = vunpack.c.l.b16 %v2613
  %v2722 = vunpack.c.l.b16 %v2625
  %v2723 = vunpack.c.l.b16 %v2637
  %v2724 = vunpack.c.l.b16 %v2649
  %v2725 = vunpack.c.l.b16 %v2661
  %v2726 = vpack.c.b16 %v2695, %v2694
  %v2727 = vpack.c.b16 %v2697, %v2696
  %v2728 = vpack.c.b16 %v2699, %v2698
  %v2729 = vpack.c.b16 %v2701, %v2700
  %v2730 = vpack.c.b16 %v2703, %v2702
  %v2731 = vpack.c.b16 %v2705, %v2704
  %v2732 = vpack.c.b16 %v2707, %v2706
  %v2733 = vpack.c.b16 %v2709, %v2708
  %v2734 = vpack.c.b16 %v2711, %v2710
  %v2735 = vpack.c.b16 %v2713, %v2712
  %v2736 = vpack.c.b16 %v2715, %v2714
  %v2737 = vpack.c.b16 %v2717, %v2716
  %v2738 = vpack.c.b16 %v2719, %v2718
  %v2739 = vpack.c.b16 %v2721, %v2720
  %v2740 = vpack.c.b16 %v2723, %v2722
  %v2741 = vpack.c.b16 %v2725, %v2724
  %v2758 = vadd.bf16 %v2230, %v2726
  %v2759 = vadd.bf16 %v2231, %v2727
  %v2760 = vadd.bf16 %v2232, %v2728
  %v2761 = vadd.bf16 %v2233, %v2729
  %v2762 = vadd.bf16 %v2234, %v2730
  %v2763 = vadd.bf16 %v2235, %v2731
  %v2764 = vadd.bf16 %v2236, %v2732
  %v2765 = vadd.bf16 %v2237, %v2733
  %v2766 = vadd.bf16 %v2238, %v2734
  %v2767 = vadd.bf16 %v2239, %v2735
  %v2768 = vadd.bf16 %v2240, %v2736
  %v2769 = vadd.bf16 %v2241, %v2737
  %v2770 = vadd.bf16 %v2242, %v2738
  %v2771 = vadd.bf16 %v2243, %v2739
  %v2772 = vadd.bf16 %v2244, %v2740
  %v2773 = vadd.bf16 %v2245, %v2741
  %v2774 = vmax.bf16 %v2758, 0
  %v2775 = vmax.bf16 %v2759, 0
  %v2776 = vmax.bf16 %v2760, 0
  %v2777 = vmax.bf16 %v2761, 0
  %v2778 = vmax.bf16 %v2762, 0
  %v2779 = vmax.bf16 %v2763, 0
  %v2780 = vmax.bf16 %v2764, 0
  %v2781 = vmax.bf16 %v2765, 0
  %v2782 = vmax.bf16 %v2766, 0
  %v2783 = vmax.bf16 %v2767, 0
  %v2784 = vmax.bf16 %v2768, 0
  %v2785 = vmax.bf16 %v2769, 0
  %v2786 = vmax.bf16 %v2770, 0
  %v2787 = vmax.bf16 %v2771, 0
  %v2788 = vmax.bf16 %v2772, 0
  %v2789 = vmax.bf16 %v2773, 0
  %v2790 = vld [vmem:[%s7] sm:$0xff]
  %v2792 = vunpack.c.l.b16 %v2790
  %v2793 = vunpack.c.h.b16 %v2790
  %v2794 = vpack.c.b16 %v2792, %v2792
  %v2795 = vpack.c.b16 %v2793, %v2793
  %2798 = vmatprep.subr.bf16.mxu0 0
  %2799 = vmatpush1.bf16.msra.mxu0 %v2774
  %2800 = vmatprep.subr.bf16.mxu0 0
  %2801 = vmatpush1.bf16.msra.mxu0 %v2775
  %2802 = vmatprep.subr.bf16.mxu0 0
  %2803 = vmatpush1.bf16.msra.mxu0 %v2776
  %2804 = vmatprep.subr.bf16.mxu0 0
  %2805 = vmatpush1.bf16.msra.mxu0 %v2777
  %2806 = vmatprep.subr.bf16.mxu0 0
  %2807 = vmatpush1.bf16.msra.mxu0 %v2778
  %2808 = vmatprep.subr.bf16.mxu0 0
  %2809 = vmatpush1.bf16.msra.mxu0 %v2779
  %2810 = vmatprep.subr.bf16.mxu0 0
  %2811 = vmatpush1.bf16.msra.mxu0 %v2780
  %2812 = vmatprep.subr.bf16.mxu0 0
  %2813 = vmatpush1.bf16.msra.mxu0 %v2781
  %2814 = vmatprep.subr.bf16.mxu0 0
  %2815 = vmatpush1.bf16.msra.mxu0 %v2782
  %2816 = vmatprep.subr.bf16.mxu0 0
  %2817 = vmatpush1.bf16.msra.mxu0 %v2783
  %2818 = vmatprep.subr.bf16.mxu0 0
  %2819 = vmatpush1.bf16.msra.mxu0 %v2784
  %2820 = vmatprep.subr.bf16.mxu0 0
  %2821 = vmatpush1.bf16.msra.mxu0 %v2785
  %2822 = vmatprep.subr.bf16.mxu0 0
  %2823 = vmatpush1.bf16.msra.mxu0 %v2786
  %2824 = vmatprep.subr.bf16.mxu0 0
  %2825 = vmatpush1.bf16.msra.mxu0 %v2787
  %2826 = vmatprep.subr.bf16.mxu0 0
  %2827 = vmatpush1.bf16.msra.mxu0 %v2788
  %2828 = vmatprep.subr.bf16.mxu0 0
  %2829 = vmatpush1.bf16.msra.mxu0 %v2789
  %2830 = vmatprep.mubr.bf16.mxu0 %v2795
  %2831 = vmatmul.mubr.bf16.gmra.mrb[0].mxu0 %v2794
  %v2832 = vpop.f32.mrb[0].mxu0
  %v2833 = vadd.f32 0.0, %v2832
  %v2834 = vpop.f32.mrb[0].mxu0
  %v2835 = vpop.f32.mrb[0].mxu0
  %v2836 = vpop.f32.mrb[0].mxu0
  %2837 = vdwg.mxu0
  %s2838 = sld [smem:[#allocation2]]
  %v2839 = vstv %s2838
  %v2840 = vadd.f32 %v2833, %v2839
  %2841 = vst [vmem:[%s9] sm:$0x1] %v2840
  // Predicated region
  $region38: #{_forward_impl.1} parent=0 // pred_check
    _
  $region39: #{_forward_impl.1} parent=0 // pred_check_branch
    %2843 = sbr.rel (0) target = $region41
  $region40: #{_forward_impl.1} parent=0 // pred_region
    _
  $region41: #{_forward_impl.1} parent=0 // pred_fallthru
    _
  // Predicated region
  $region42: #{_forward_impl.1} parent=0 // pred_check
    _
  $region43: #{_forward_impl.1} parent=0 // pred_check_branch
    %2845 = sbr.rel (0) target = $region45
  $region44: #{_forward_impl.1} parent=0 // pred_region
    _
  $region45: #{_forward_impl.1} parent=0 // pred_fallthru
    _

</llo_original>
